<compile_context>
chip_gen: v7x
topology: tpu7x:2x2x1
jax: 0.10.0
libtpu: 0.0.40
codegen_flags: <defaults>
</compile_context>

<pallas_src>
import functools
import math

import jax
import jax.numpy as jnp
import numpy as np
from jax import lax
from jax.experimental import pallas as pl
from jax.experimental.pallas import tpu as pltpu


# ---------------------------------------------------------------------------
# Kernel 1: fused Q/K/V projection (scale already folded into Wq / bq)
# ---------------------------------------------------------------------------
def _qkv_proj_kernel(x_ref, wq_ref, wk_ref, wv_ref, bq_ref, bk_ref, bv_ref,
                     q_ref, k_ref, v_ref):
    x = x_ref[...]                                               # [tm, D_in]
    q = jnp.dot(x, wq_ref[...], preferred_element_type=jnp.float32) + bq_ref[...]
    k = jnp.dot(x, wk_ref[...], preferred_element_type=jnp.float32) + bk_ref[...]
    v = jnp.dot(x, wv_ref[...], preferred_element_type=jnp.float32) + bv_ref[...]
    q_ref[...] = q.astype(q_ref.dtype)                           # lane-dense [tm, H]
    k_ref[...] = k.astype(k_ref.dtype)
    v_ref[...] = v.astype(v_ref.dtype)


def _qkv_projection(x, wq, wk, wv, bq, bk, bv, *, block_rows, compute_dtype,
                    vmem_limit_bytes):
    B, S, D_in = x.shape
    H = wq.shape[1]
    tm = min(block_rows, S)
    assert S % tm == 0, "S must divide the projection row tile"

    # Constant index_maps -> weight/bias DMAs are issued only once.
    w_spec = pl.BlockSpec((D_in, H), lambda b, i: (0, 0))
    b_spec = pl.BlockSpec((1, H), lambda b, i: (0, 0))
    x_spec = pl.BlockSpec((None, tm, D_in), lambda b, i: (b, i, 0))
    o_spec = pl.BlockSpec((None, tm, H), lambda b, i: (b, i, 0))

    out_sds = jax.ShapeDtypeStruct((B, S, H), compute_dtype)
    return pl.pallas_call(
        _qkv_proj_kernel,
        out_shape=(out_sds, out_sds, out_sds),
        grid=(B, S // tm),
        in_specs=[x_spec, w_spec, w_spec, w_spec, b_spec, b_spec, b_spec],
        out_specs=(o_spec, o_spec, o_spec),
        compiler_params=pltpu.CompilerParams(
            dimension_semantics=("parallel", "parallel"),
            vmem_limit_bytes=vmem_limit_bytes),
    )(x, wq, wk, wv, bq, bk, bv)


# ---------------------------------------------------------------------------
# Kernel 2: head-parallel flash attention (online softmax, f32 accumulation)
# ---------------------------------------------------------------------------
def _flash_attn_kernel(q_ref, k_ref, v_ref, o_ref, m_sc, l_sc, acc_sc,
                       *, approx_recip):
    """One grid step = one (batch b, head h, q-tile qi, kv-tile ki).

    q_ref : [tq, dh]   (scale pre-folded)      o_ref : [tq, dh]
    k_ref : [tk, dh]                           m_sc  : [tq, 1]  running max (f32)
    v_ref : [tk, dh]                           l_sc  : [tq, 1]  running denom (f32)
                                               acc_sc: [tq, dh] context acc (f32)
    """
    ki = pl.program_id(3)

    @pl.when(ki == 0)
    def _init():
        m_sc[...] = jnp.full_like(m_sc, -jnp.inf)
        l_sc[...] = jnp.zeros_like(l_sc)
        acc_sc[...] = jnp.zeros_like(acc_sc)

    q = q_ref[...]
    k = k_ref[...]
    v = v_ref[...]

    # scores[q, k] = sum_d q[q, d] * k[k, d]  (contract on dh; no explicit .T)
    s = lax.dot_general(q, k, (((1,), (1,)), ((), ())),
                        preferred_element_type=jnp.float32)      # [tq, tk] f32

    # Online-softmax update (all element-wise math in f32; v5e-safe).
    m_prev = m_sc[...]
    m_new = jnp.maximum(m_prev, jnp.max(s, axis=-1, keepdims=True))
    alpha = jnp.exp(m_prev - m_new)
    p = jnp.exp(s - m_new)                                        # [tq, tk] f32
    l_sc[...] = alpha * l_sc[...] + jnp.sum(p, axis=-1, keepdims=True)
    acc_sc[...] = alpha * acc_sc[...] + jnp.dot(
        p.astype(v.dtype), v, preferred_element_type=jnp.float32)
    m_sc[...] = m_new

    @pl.when(ki == pl.num_programs(3) - 1)
    def _finalize():
        if approx_recip:
            # EUP reciprocal (free VLIW slot) on the fast path only.
            ctx = acc_sc[...] * pl.reciprocal(l_sc[...], approx=True)
        else:
            ctx = acc_sc[...] / l_sc[...]
        o_ref[...] = ctx.astype(o_ref.dtype)


def _flash_attention(qh, kh, vh, *, block_q, block_k, out_dtype, approx_recip,
                     vmem_limit_bytes):
    B, nh, S, dh = qh.shape
    tq = min(block_q, S)
    tk = min(block_k, S)
    assert S % tq == 0 and S % tk == 0, "S must divide the attention tiles"
    nq, nk = S // tq, S // tk

    kernel = functools.partial(_flash_attn_kernel, approx_recip=approx_recip)
    q_spec = pl.BlockSpec((None, None, tq, dh), lambda b, h, qi, ki: (b, h, qi, 0))
    kv_spec = pl.BlockSpec((None, None, tk, dh), lambda b, h, qi, ki: (b, h, ki, 0))
    o_spec = pl.BlockSpec((None, None, tq, dh), lambda b, h, qi, ki: (b, h, qi, 0))

    return pl.pallas_call(
        kernel,
        out_shape=jax.ShapeDtypeStruct((B, nh, S, dh), out_dtype),
        grid=(B, nh, nq, nk),
        in_specs=[q_spec, kv_spec, kv_spec],
        out_specs=o_spec,
        scratch_shapes=[
            pltpu.VMEM((tq, 1), jnp.float32),     # running max m
            pltpu.VMEM((tq, 1), jnp.float32),     # running denom l
            pltpu.VMEM((tq, dh), jnp.float32),    # un-normalized context
        ],
        compiler_params=pltpu.CompilerParams(
            dimension_semantics=("parallel", "parallel", "parallel", "arbitrary"),
            vmem_limit_bytes=vmem_limit_bytes),
    )(qh, kh, vh)


# ---------------------------------------------------------------------------
# Public wrapper: matches PyTorch selfAttention.forward semantics.
#   x: [B, S, D_in], W*: [D_in, H] (y = x @ W + b), b*: [H]  ->  [B, S, H]
# ---------------------------------------------------------------------------
def self_attention(x, wq, wk, wv, bq, bk, bv, *, num_heads,
                   block_q=256, block_k=256, block_rows=256,
                   compute_dtype=jnp.bfloat16, out_dtype=None,
                   vmem_limit_bytes=48 * 1024 * 1024):
    B, S, D_in = x.shape
    H = wq.shape[1]
    assert H % num_heads == 0, "hidden size must be a multiple of num_heads"
    dh = H // num_heads
    out_dtype = x.dtype if out_dtype is None else out_dtype

    # Fold 1/sqrt(dh) into the Q projection (host side, f32).
    scale = 1.0 / math.sqrt(dh)
    wq_s = (wq.astype(jnp.float32) * scale).astype(compute_dtype)
    bq_s = (bq.astype(jnp.float32) * scale).reshape(1, H)      # biases stay f32
    wk_c = wk.astype(compute_dtype)
    wv_c = wv.astype(compute_dtype)
    bk_c = bk.astype(jnp.float32).reshape(1, H)
    bv_c = bv.astype(jnp.float32).reshape(1, H)
    x_c = x.astype(compute_dtype)

    # (1) Project Q/K/V once.
    q, k, v = _qkv_projection(
        x_c, wq_s, wk_c, wv_c, bq_s, bk_c, bv_c,
        block_rows=block_rows, compute_dtype=compute_dtype,
        vmem_limit_bytes=vmem_limit_bytes)

    # Head split [B, S, H] -> [B, nh, S, dh]: pure XLA layout pass in the
    # compute dtype (cheap vs. attention; keeps the kernels free of sub-lane
    # masked head slicing).
    def to_heads(t):
        return t.reshape(B, S, num_heads, dh).transpose(0, 2, 1, 3)

    approx_recip = np.dtype(compute_dtype) != np.dtype(np.float32)

    # (2) Flash attention, heads on a parallel grid axis.
    ctx = _flash_attention(
        to_heads(q), to_heads(k), to_heads(v),
        block_q=block_q, block_k=block_k, out_dtype=out_dtype,
        approx_recip=approx_recip, vmem_limit_bytes=vmem_limit_bytes)

    # Head merge == torch permute(0, 2, 1, 3).contiguous().view(..., H).
    return ctx.transpose(0, 2, 1, 3).reshape(B, S, H)


# ---------------------------------------------------------------------------
# Pure-JAX reference (replicates the PyTorch forward) for validation.
# ---------------------------------------------------------------------------
def _reference(x, wq, wk, wv, bq, bk, bv, *, num_heads):
    B, S, _ = x.shape
    H = wq.shape[1]
    dh = H // num_heads

    def heads(t):
        return t.reshape(B, S, num_heads, dh).transpose(0, 2, 1, 3)

    q = heads(x @ wq + bq)
    k = heads(x @ wk + bk)
    v = heads(x @ wv + bv)
    scores = jnp.einsum("bhqd,bhkd->bhqk", q, k) / math.sqrt(dh)
    probs = jax.nn.softmax(scores, axis=-1)
    ctx = jnp.einsum("bhqk,bhkd->bhqd", probs, v)
    return ctx.transpose(0, 2, 1, 3).reshape(B, S, H)


if __name__ == "__main__":
    # Small shapes consistent with the module; S spans several kv tiles so the
    # online-softmax accumulation across grid steps is actually exercised.
    B, S = 2, 64
    input_size = 32
    hidden_size = 32
    num_heads = 4

    key = jax.random.PRNGKey(0)
    kx, kwq, kwk, kwv, kbq, kbk, kbv = jax.random.split(key, 7)

    x = jax.random.normal(kx, (B, S, input_size), dtype=jnp.float32)
    bound = 1.0 / math.sqrt(input_size)
    wq = jax.random.uniform(kwq, (input_size, hidden_size), jnp.float32, -bound, bound)
    wk = jax.random.uniform(kwk, (input_size, hidden_size), jnp.float32, -bound, bound)
    wv = jax.random.uniform(kwv, (input_size, hidden_size), jnp.float32, -bound, bound)
    bq = jax.random.uniform(kbq, (hidden_size,), jnp.float32, -bound, bound)
    bk = jax.random.uniform(kbk, (hidden_size,), jnp.float32, -bound, bound)
    bv = jax.random.uniform(kbv, (hidden_size,), jnp.float32, -bound, bound)

    ref = _reference(x, wq, wk, wv, bq, bk, bv, num_heads=num_heads)

    # Exact-path check: f32 MXU operands, exact reciprocal.
    run_f32 = jax.jit(functools.partial(
        self_attention, num_heads=num_heads, block_q=16, block_k=16,
        compute_dtype=jnp.float32))
    out_f32 = jax.block_until_ready(run_f32(x, wq, wk, wv, bq, bk, bv))
    if not jnp.allclose(out_f32, ref, atol=1e-2, rtol=1e-2):
        raise AssertionError("f32 Pallas self-attention does not match reference")

    # Default fast path: bf16 MXU operands, f32 accumulation, approx reciprocal.
    run_bf16 = jax.jit(functools.partial(
        self_attention, num_heads=num_heads, block_q=16, block_k=16))
    out_bf16 = jax.block_until_ready(run_bf16(x, wq, wk, wv, bq, bk, bv))
    if not jnp.allclose(out_bf16, ref, atol=5e-2, rtol=5e-2):
        raise AssertionError("bf16 Pallas self-attention does not match reference")

    print("KERNEL_OK")
</pallas_src>

<mosaic_0001>
module attributes {stable_mosaic.version = 11 : i64} {
  func.func @_qkv_proj_kernel(%arg0: i32, %arg1: i32, %arg2: memref<1x64x32xf32, #tpu.memory_space<vmem>>, %arg3: memref<32x32xf32, #tpu.memory_space<vmem>>, %arg4: memref<32x32xf32, #tpu.memory_space<vmem>>, %arg5: memref<32x32xf32, #tpu.memory_space<vmem>>, %arg6: memref<1x32xf32, #tpu.memory_space<vmem>>, %arg7: memref<1x32xf32, #tpu.memory_space<vmem>>, %arg8: memref<1x32xf32, #tpu.memory_space<vmem>>, %arg9: memref<1x64x32xf32, #tpu.memory_space<vmem>>, %arg10: memref<1x64x32xf32, #tpu.memory_space<vmem>>, %arg11: memref<1x64x32xf32, #tpu.memory_space<vmem>>) attributes {dimension_semantics = [#tpu.dimension_semantics<parallel>, #tpu.dimension_semantics<parallel>], iteration_bounds = array<i64: 2, 1>, scalar_prefetch = 0 : i64, scratch_operands = 0 : i64, tpu.core_type = #tpu.core_type<tc>, window_params = [{transform_indices = @transform_0, window_bounds = array<i64: 1, 64, 32>}, {pipeline_mode = #tpu.pipeline_mode<synchronous>, transform_indices = @transform_1, window_bounds = array<i64: 32, 32>}, {pipeline_mode = #tpu.pipeline_mode<synchronous>, transform_indices = @transform_2, window_bounds = array<i64: 32, 32>}, {pipeline_mode = #tpu.pipeline_mode<synchronous>, transform_indices = @transform_3, window_bounds = array<i64: 32, 32>}, {pipeline_mode = #tpu.pipeline_mode<synchronous>, transform_indices = @transform_4, window_bounds = array<i64: 1, 32>}, {pipeline_mode = #tpu.pipeline_mode<synchronous>, transform_indices = @transform_5, window_bounds = array<i64: 1, 32>}, {pipeline_mode = #tpu.pipeline_mode<synchronous>, transform_indices = @transform_6, window_bounds = array<i64: 1, 32>}, {transform_indices = @transform_7, window_bounds = array<i64: 1, 64, 32>}, {transform_indices = @transform_8, window_bounds = array<i64: 1, 64, 32>}, {transform_indices = @transform_9, window_bounds = array<i64: 1, 64, 32>}]} {
    %c0 = arith.constant 0 : index
    %c0_0 = arith.constant 0 : index
    %c0_1 = arith.constant 0 : index
    %0 = vector.load %arg2[%c0, %c0_0, %c0_1] : memref<1x64x32xf32, #tpu.memory_space<vmem>>, vector<1x64x32xf32>
    %1 = vector.shape_cast %0 : vector<1x64x32xf32> to vector<64x32xf32>
    %c0_2 = arith.constant 0 : index
    %c0_3 = arith.constant 0 : index
    %2 = vector.load %arg3[%c0_2, %c0_3] : memref<32x32xf32, #tpu.memory_space<vmem>>, vector<32x32xf32>
    %cst = arith.constant dense<0.000000e+00> : vector<64x32xf32>
    %3 = tpu.matmul %1, %2, %cst {dimension_numbers = #tpu.dot_dimension_numbers<[1], [0], [0], [1], [0, 0, 1, 1], [], []>} : vector<64x32xf32>, vector<32x32xf32>, vector<64x32xf32> -> vector<64x32xf32>
    %c0_4 = arith.constant 0 : index
    %c0_5 = arith.constant 0 : index
    %4 = vector.load %arg6[%c0_4, %c0_5] : memref<1x32xf32, #tpu.memory_space<vmem>>, vector<1x32xf32>
    %5 = vector.broadcast %4 : vector<1x32xf32> to vector<64x32xf32>
    %6 = arith.addf %3, %5 : vector<64x32xf32>
    %c0_6 = arith.constant 0 : index
    %c0_7 = arith.constant 0 : index
    %7 = vector.load %arg4[%c0_6, %c0_7] : memref<32x32xf32, #tpu.memory_space<vmem>>, vector<32x32xf32>
    %cst_8 = arith.constant dense<0.000000e+00> : vector<64x32xf32>
    %8 = tpu.matmul %1, %7, %cst_8 {dimension_numbers = #tpu.dot_dimension_numbers<[1], [0], [0], [1], [0, 0, 1, 1], [], []>} : vector<64x32xf32>, vector<32x32xf32>, vector<64x32xf32> -> vector<64x32xf32>
    %c0_9 = arith.constant 0 : index
    %c0_10 = arith.constant 0 : index
    %9 = vector.load %arg7[%c0_9, %c0_10] : memref<1x32xf32, #tpu.memory_space<vmem>>, vector<1x32xf32>
    %10 = vector.broadcast %9 : vector<1x32xf32> to vector<64x32xf32>
    %11 = arith.addf %8, %10 : vector<64x32xf32>
    %c0_11 = arith.constant 0 : index
    %c0_12 = arith.constant 0 : index
    %12 = vector.load %arg5[%c0_11, %c0_12] : memref<32x32xf32, #tpu.memory_space<vmem>>, vector<32x32xf32>
    %cst_13 = arith.constant dense<0.000000e+00> : vector<64x32xf32>
    %13 = tpu.matmul %1, %12, %cst_13 {dimension_numbers = #tpu.dot_dimension_numbers<[1], [0], [0], [1], [0, 0, 1, 1], [], []>} : vector<64x32xf32>, vector<32x32xf32>, vector<64x32xf32> -> vector<64x32xf32>
    %c0_14 = arith.constant 0 : index
    %c0_15 = arith.constant 0 : index
    %14 = vector.load %arg8[%c0_14, %c0_15] : memref<1x32xf32, #tpu.memory_space<vmem>>, vector<1x32xf32>
    %15 = vector.broadcast %14 : vector<1x32xf32> to vector<64x32xf32>
    %16 = arith.addf %13, %15 : vector<64x32xf32>
    %c0_16 = arith.constant 0 : index
    %c0_17 = arith.constant 0 : index
    %c0_18 = arith.constant 0 : index
    %17 = vector.load %arg9[%c0_16, %c0_17, %c0_18] : memref<1x64x32xf32, #tpu.memory_space<vmem>>, vector<1x64x32xf32>
    %18 = vector.shape_cast %17 : vector<1x64x32xf32> to vector<64x32xf32>
    %19 = vector.shape_cast %6 : vector<64x32xf32> to vector<1x64x32xf32>
    tpu.vector_store %arg9[%c0_16, %c0_17, %c0_18], %19 {strides = array<i32>} : memref<1x64x32xf32, #tpu.memory_space<vmem>>, vector<1x64x32xf32>,
    %c0_19 = arith.constant 0 : index
    %c0_20 = arith.constant 0 : index
    %c0_21 = arith.constant 0 : index
    %20 = vector.load %arg10[%c0_19, %c0_20, %c0_21] : memref<1x64x32xf32, #tpu.memory_space<vmem>>, vector<1x64x32xf32>
    %21 = vector.shape_cast %20 : vector<1x64x32xf32> to vector<64x32xf32>
    %22 = vector.shape_cast %11 : vector<64x32xf32> to vector<1x64x32xf32>
    tpu.vector_store %arg10[%c0_19, %c0_20, %c0_21], %22 {strides = array<i32>} : memref<1x64x32xf32, #tpu.memory_space<vmem>>, vector<1x64x32xf32>,
    %c0_22 = arith.constant 0 : index
    %c0_23 = arith.constant 0 : index
    %c0_24 = arith.constant 0 : index
    %23 = vector.load %arg11[%c0_22, %c0_23, %c0_24] : memref<1x64x32xf32, #tpu.memory_space<vmem>>, vector<1x64x32xf32>
    %24 = vector.shape_cast %23 : vector<1x64x32xf32> to vector<64x32xf32>
    %25 = vector.shape_cast %16 : vector<64x32xf32> to vector<1x64x32xf32>
    tpu.vector_store %arg11[%c0_22, %c0_23, %c0_24], %25 {strides = array<i32>} : memref<1x64x32xf32, #tpu.memory_space<vmem>>, vector<1x64x32xf32>,
    return
  }
  func.func @transform_0(%arg0: i32, %arg1: i32) -> (i32, i32, i32) {
    %c0_i32 = arith.constant 0 : i32
    %c0_i32_0 = arith.constant 0 : i32
    return %arg0, %arg1, %c0_i32 : i32, i32, i32
  }
  func.func @transform_1(%arg0: i32, %arg1: i32) -> (i32, i32) {
    %c0_i32 = arith.constant 0 : i32
    %c0_i32_0 = arith.constant 0 : i32
    %c0_i32_1 = arith.constant 0 : i32
    return %c0_i32, %c0_i32_0 : i32, i32
  }
  func.func @transform_2(%arg0: i32, %arg1: i32) -> (i32, i32) {
    %c0_i32 = arith.constant 0 : i32
    %c0_i32_0 = arith.constant 0 : i32
    %c0_i32_1 = arith.constant 0 : i32
    return %c0_i32, %c0_i32_0 : i32, i32
  }
  func.func @transform_3(%arg0: i32, %arg1: i32) -> (i32, i32) {
    %c0_i32 = arith.constant 0 : i32
    %c0_i32_0 = arith.constant 0 : i32
    %c0_i32_1 = arith.constant 0 : i32
    return %c0_i32, %c0_i32_0 : i32, i32
  }
  func.func @transform_4(%arg0: i32, %arg1: i32) -> (i32, i32) {
    %c0_i32 = arith.constant 0 : i32
    %c0_i32_0 = arith.constant 0 : i32
    %c0_i32_1 = arith.constant 0 : i32
    return %c0_i32, %c0_i32_0 : i32, i32
  }
  func.func @transform_5(%arg0: i32, %arg1: i32) -> (i32, i32) {
    %c0_i32 = arith.constant 0 : i32
    %c0_i32_0 = arith.constant 0 : i32
    %c0_i32_1 = arith.constant 0 : i32
    return %c0_i32, %c0_i32_0 : i32, i32
  }
  func.func @transform_6(%arg0: i32, %arg1: i32) -> (i32, i32) {
    %c0_i32 = arith.constant 0 : i32
    %c0_i32_0 = arith.constant 0 : i32
    %c0_i32_1 = arith.constant 0 : i32
    return %c0_i32, %c0_i32_0 : i32, i32
  }
  func.func @transform_7(%arg0: i32, %arg1: i32) -> (i32, i32, i32) {
    %c0_i32 = arith.constant 0 : i32
    %c0_i32_0 = arith.constant 0 : i32
    return %arg0, %arg1, %c0_i32 : i32, i32, i32
  }
  func.func @transform_8(%arg0: i32, %arg1: i32) -> (i32, i32, i32) {
    %c0_i32 = arith.constant 0 : i32
    %c0_i32_0 = arith.constant 0 : i32
    return %arg0, %arg1, %c0_i32 : i32, i32, i32
  }
  func.func @transform_9(%arg0: i32, %arg1: i32) -> (i32, i32, i32) {
    %c0_i32 = arith.constant 0 : i32
    %c0_i32_0 = arith.constant 0 : i32
    return %arg0, %arg1, %c0_i32 : i32, i32, i32
  }
}

module attributes {stable_mosaic.version = 11 : i64} {
  func.func @_flash_attn_kernel(%arg0: i32, %arg1: i32, %arg2: i32, %arg3: i32, %arg4: memref<1x1x16x8xf32, #tpu.memory_space<vmem>>, %arg5: memref<1x1x16x8xf32, #tpu.memory_space<vmem>>, %arg6: memref<1x1x16x8xf32, #tpu.memory_space<vmem>>, %arg7: memref<1x1x16x8xf32, #tpu.memory_space<vmem>>, %arg8: memref<16x1xf32, #tpu.memory_space<vmem>>, %arg9: memref<16x1xf32, #tpu.memory_space<vmem>>, %arg10: memref<16x8xf32, #tpu.memory_space<vmem>>) attributes {dimension_semantics = [#tpu.dimension_semantics<parallel>, #tpu.dimension_semantics<parallel>, #tpu.dimension_semantics<parallel>, #tpu.dimension_semantics<arbitrary>], iteration_bounds = array<i64: 2, 4, 4, 4>, scalar_prefetch = 0 : i64, scratch_operands = 3 : i64, tpu.core_type = #tpu.core_type<tc>, window_params = [{transform_indices = @transform_0, window_bounds = array<i64: 1, 1, 16, 8>}, {transform_indices = @transform_1, window_bounds = array<i64: 1, 1, 16, 8>}, {transform_indices = @transform_2, window_bounds = array<i64: 1, 1, 16, 8>}, {transform_indices = @transform_3, window_bounds = array<i64: 1, 1, 16, 8>}]} {
    %c0_i32 = arith.constant 0 : i32
    %0 = arith.cmpi eq, %arg3, %c0_i32 : i32
    %1 = arith.extui %0 : i1 to i32
    %c0_i32_0 = arith.constant 0 : i32
    %2 = arith.cmpi ne, %1, %c0_i32_0 : i32
    scf.if %2 {
      %cst_28 = arith.constant 0xFF800000 : f32
      %35 = vector.broadcast %cst_28 : f32 to vector<16x1xf32>
      %c0_29 = arith.constant 0 : index
      %c0_30 = arith.constant 0 : index
      %36 = vector.load %arg8[%c0_29, %c0_30] : memref<16x1xf32, #tpu.memory_space<vmem>>, vector<16x1xf32>
      tpu.vector_store %arg8[%c0_29, %c0_30], %35 {strides = array<i32>} : memref<16x1xf32, #tpu.memory_space<vmem>>, vector<16x1xf32>,
      %cst_31 = arith.constant 0.000000e+00 : f32
      %37 = vector.broadcast %cst_31 : f32 to vector<16x1xf32>
      %c0_32 = arith.constant 0 : index
      %c0_33 = arith.constant 0 : index
      %38 = vector.load %arg9[%c0_32, %c0_33] : memref<16x1xf32, #tpu.memory_space<vmem>>, vector<16x1xf32>
      tpu.vector_store %arg9[%c0_32, %c0_33], %37 {strides = array<i32>} : memref<16x1xf32, #tpu.memory_space<vmem>>, vector<16x1xf32>,
      %cst_34 = arith.constant 0.000000e+00 : f32
      %39 = vector.broadcast %cst_34 : f32 to vector<16x8xf32>
      %c0_35 = arith.constant 0 : index
      %c0_36 = arith.constant 0 : index
      %40 = vector.load %arg10[%c0_35, %c0_36] : memref<16x8xf32, #tpu.memory_space<vmem>>, vector<16x8xf32>
      tpu.vector_store %arg10[%c0_35, %c0_36], %39 {strides = array<i32>} : memref<16x8xf32, #tpu.memory_space<vmem>>, vector<16x8xf32>,
    } else {
    }
    %c0 = arith.constant 0 : index
    %c0_1 = arith.constant 0 : index
    %c0_2 = arith.constant 0 : index
    %c0_3 = arith.constant 0 : index
    %3 = vector.load %arg4[%c0, %c0_1, %c0_2, %c0_3] : memref<1x1x16x8xf32, #tpu.memory_space<vmem>>, vector<1x1x16x8xf32>
    %4 = vector.shape_cast %3 : vector<1x1x16x8xf32> to vector<16x8xf32>
    %c0_4 = arith.constant 0 : index
    %c0_5 = arith.constant 0 : index
    %c0_6 = arith.constant 0 : index
    %c0_7 = arith.constant 0 : index
    %5 = vector.load %arg5[%c0_4, %c0_5, %c0_6, %c0_7] : memref<1x1x16x8xf32, #tpu.memory_space<vmem>>, vector<1x1x16x8xf32>
    %6 = vector.shape_cast %5 : vector<1x1x16x8xf32> to vector<16x8xf32>
    %c0_8 = arith.constant 0 : index
    %c0_9 = arith.constant 0 : index
    %c0_10 = arith.constant 0 : index
    %c0_11 = arith.constant 0 : index
    %7 = vector.load %arg6[%c0_8, %c0_9, %c0_10, %c0_11] : memref<1x1x16x8xf32, #tpu.memory_space<vmem>>, vector<1x1x16x8xf32>
    %8 = vector.shape_cast %7 : vector<1x1x16x8xf32> to vector<16x8xf32>
    %cst = arith.constant dense<0.000000e+00> : vector<16x16xf32>
    %9 = tpu.matmul %4, %6, %cst {dimension_numbers = #tpu.dot_dimension_numbers<[1], [1], [0], [0], [0, 0, 1, 0], [], []>} : vector<16x8xf32>, vector<16x8xf32>, vector<16x16xf32> -> vector<16x16xf32>
    %c0_12 = arith.constant 0 : index
    %c0_13 = arith.constant 0 : index
    %10 = vector.load %arg8[%c0_12, %c0_13] : memref<16x1xf32, #tpu.memory_space<vmem>>, vector<16x1xf32>
    %cst_14 = arith.constant dense<0xFF800000> : vector<16xf32>
    %11 = vector.multi_reduction <maximumf>, %9, %cst_14 [1] : vector<16x16xf32> to vector<16xf32>
    %12 = vector.shape_cast %11 : vector<16xf32> to vector<16x1xf32>
    %13 = arith.maximumf %10, %12 : vector<16x1xf32>
    %14 = arith.subf %10, %13 : vector<16x1xf32>
    %15 = math.exp %14 : vector<16x1xf32>
    %16 = vector.broadcast %13 : vector<16x1xf32> to vector<16x16xf32>
    %17 = arith.subf %9, %16 : vector<16x16xf32>
    %18 = math.exp %17 : vector<16x16xf32>
    %c0_15 = arith.constant 0 : index
    %c0_16 = arith.constant 0 : index
    %19 = vector.load %arg9[%c0_15, %c0_16] : memref<16x1xf32, #tpu.memory_space<vmem>>, vector<16x1xf32>
    %20 = arith.mulf %15, %19 : vector<16x1xf32>
    %cst_17 = arith.constant dense<0.000000e+00> : vector<16xf32>
    %21 = vector.multi_reduction <add>, %18, %cst_17 [1] : vector<16x16xf32> to vector<16xf32>
    %22 = vector.shape_cast %21 : vector<16xf32> to vector<16x1xf32>
    %23 = arith.addf %20, %22 : vector<16x1xf32>
    %c0_18 = arith.constant 0 : index
    %c0_19 = arith.constant 0 : index
    %24 = vector.load %arg9[%c0_18, %c0_19] : memref<16x1xf32, #tpu.memory_space<vmem>>, vector<16x1xf32>
    tpu.vector_store %arg9[%c0_18, %c0_19], %23 {strides = array<i32>} : memref<16x1xf32, #tpu.memory_space<vmem>>, vector<16x1xf32>,
    %c0_20 = arith.constant 0 : index
    %c0_21 = arith.constant 0 : index
    %25 = vector.load %arg10[%c0_20, %c0_21] : memref<16x8xf32, #tpu.memory_space<vmem>>, vector<16x8xf32>
    %26 = vector.broadcast %15 : vector<16x1xf32> to vector<16x8xf32>
    %27 = arith.mulf %26, %25 : vector<16x8xf32>
    %cst_22 = arith.constant dense<0.000000e+00> : vector<16x8xf32>
    %28 = tpu.matmul %18, %8, %cst_22 {dimension_numbers = #tpu.dot_dimension_numbers<[1], [0], [0], [1], [0, 0, 1, 1], [], []>} : vector<16x16xf32>, vector<16x8xf32>, vector<16x8xf32> -> vector<16x8xf32>
    %29 = arith.addf %27, %28 : vector<16x8xf32>
    %c0_23 = arith.constant 0 : index
    %c0_24 = arith.constant 0 : index
    %30 = vector.load %arg10[%c0_23, %c0_24] : memref<16x8xf32, #tpu.memory_space<vmem>>, vector<16x8xf32>
    tpu.vector_store %arg10[%c0_23, %c0_24], %29 {strides = array<i32>} : memref<16x8xf32, #tpu.memory_space<vmem>>, vector<16x8xf32>,
    %c0_25 = arith.constant 0 : index
    %c0_26 = arith.constant 0 : index
    %31 = vector.load %arg8[%c0_25, %c0_26] : memref<16x1xf32, #tpu.memory_space<vmem>>, vector<16x1xf32>
    tpu.vector_store %arg8[%c0_25, %c0_26], %13 {strides = array<i32>} : memref<16x1xf32, #tpu.memory_space<vmem>>, vector<16x1xf32>,
    %c3_i32 = arith.constant 3 : i32
    %32 = arith.cmpi eq, %arg3, %c3_i32 : i32
    %33 = arith.extui %32 : i1 to i32
    %c0_i32_27 = arith.constant 0 : i32
    %34 = arith.cmpi ne, %33, %c0_i32_27 : i32
    scf.if %34 {
      %c0_28 = arith.constant 0 : index
      %c0_29 = arith.constant 0 : index
      %35 = vector.load %arg10[%c0_28, %c0_29] : memref<16x8xf32, #tpu.memory_space<vmem>>, vector<16x8xf32>
      %c0_30 = arith.constant 0 : index
      %c0_31 = arith.constant 0 : index
      %36 = vector.load %arg9[%c0_30, %c0_31] : memref<16x1xf32, #tpu.memory_space<vmem>>, vector<16x1xf32>
      %37 = vector.broadcast %36 : vector<16x1xf32> to vector<16x8xf32>
      %38 = arith.divf %35, %37 : vector<16x8xf32>
      %c0_32 = arith.constant 0 : index
      %c0_33 = arith.constant 0 : index
      %c0_34 = arith.constant 0 : index
      %c0_35 = arith.constant 0 : index
      %39 = vector.load %arg7[%c0_32, %c0_33, %c0_34, %c0_35] : memref<1x1x16x8xf32, #tpu.memory_space<vmem>>, vector<1x1x16x8xf32>
      %40 = vector.shape_cast %39 : vector<1x1x16x8xf32> to vector<16x8xf32>
      %41 = vector.shape_cast %38 : vector<16x8xf32> to vector<1x1x16x8xf32>
      tpu.vector_store %arg7[%c0_32, %c0_33, %c0_34, %c0_35], %41 {strides = array<i32>} : memref<1x1x16x8xf32, #tpu.memory_space<vmem>>, vector<1x1x16x8xf32>,
    } else {
    }
    return
  }
  func.func @transform_0(%arg0: i32, %arg1: i32, %arg2: i32, %arg3: i32) -> (i32, i32, i32, i32) {
    %c0_i32 = arith.constant 0 : i32
    %c0_i32_0 = arith.constant 0 : i32
    return %arg0, %arg1, %arg2, %c0_i32 : i32, i32, i32, i32
  }
  func.func @transform_1(%arg0: i32, %arg1: i32, %arg2: i32, %arg3: i32) -> (i32, i32, i32, i32) {
    %c0_i32 = arith.constant 0 : i32
    %c0_i32_0 = arith.constant 0 : i32
    return %arg0, %arg1, %arg3, %c0_i32 : i32, i32, i32, i32
  }
  func.func @transform_2(%arg0: i32, %arg1: i32, %arg2: i32, %arg3: i32) -> (i32, i32, i32, i32) {
    %c0_i32 = arith.constant 0 : i32
    %c0_i32_0 = arith.constant 0 : i32
    return %arg0, %arg1, %arg3, %c0_i32 : i32, i32, i32, i32
  }
  func.func @transform_3(%arg0: i32, %arg1: i32, %arg2: i32, %arg3: i32) -> (i32, i32, i32, i32) {
    %c0_i32 = arith.constant 0 : i32
    %c0_i32_0 = arith.constant 0 : i32
    return %arg0, %arg1, %arg2, %c0_i32 : i32, i32, i32, i32
  }
}

</mosaic_0001>

<llo_original>
// kernel: self_attention.2
$region0: #{self_attention.2}
  #allocation0 [shape = 'u32[]', space=smem, size = 0x4, offset = 0x4, fixed_abs, tag = 'smem constant byte address 0x4 - core index']
  #allocation1 [shape = 'u32[144,128]{1,0:T(1,128)}', space=vmem, size = 0x12000, scoped, tag = 'internal scratch']
  %s0 = inlined_call_operand.vmem [shape: f32[2,64,32], index: 0, kind: input, shape index: {}]
  %s1 = inlined_call_operand.vmem [shape: f32[32,32], index: 1, kind: input, shape index: {}]
  %s2 = inlined_call_operand.vmem [shape: f32[32,32], index: 2, kind: input, shape index: {}]
  %s3 = inlined_call_operand.vmem [shape: f32[32,32], index: 3, kind: input, shape index: {}]
  %s4 = inlined_call_operand.vmem [shape: f32[1,32], index: 4, kind: input, shape index: {}]
  %s5 = inlined_call_operand.vmem [shape: f32[1,32], index: 5, kind: input, shape index: {}]
  %s6 = inlined_call_operand.vmem [shape: f32[1,32], index: 6, kind: input, shape index: {}]
  %s7 = inlined_call_operand.vmem [shape: f32[2,64,32], index: 7, kind: output, shape index: {0}]
  %s8 = inlined_call_operand.vmem [shape: f32[2,64,32], index: 8, kind: output, shape index: {1}]
  %s9 = inlined_call_operand.vmem [shape: f32[2,64,32], index: 9, kind: output, shape index: {2}]
  %10 = xla_tuple %s7, %s8, %s9
  %s11 = sld [smem:[#allocation0]]
  $region77: #{self_attention.2} parent=0
    _
  %s13 = ssub.s32 1, %s11
  %s14 = scalar_select 0, %s13, %s11
  loop: start=0, step=1, limit=4
  $region2: #{self_attention.2} parent=0 // loop_pre_header
    _
  $region3: #{self_attention.2} parent=0 // loop_header
    %s16 = sphi 0, %s20
    %p17 = scmp.ge.s32.totalorder %s16, 4
    %s23 = sphi 0, %s35
    %s24 = sphi 0, %s31
    %s25 = sphi 0, %s23
    %s26 = sphi 0, %s24
    %s27 = sphi 0, %s25
    %s28 = sphi 0, %s26
    %s40 = sphi 0, %s42
    %s43 = sphi 0, %s40
    %s44 = sphi 0, %s43
    %s60 = sphi 0, %s44
    %s64 = sphi 0, %s64
    %s66 = sphi 0, %s64
    %s67 = sphi 0, %s66
    %s81 = sphi 0, %s67
    %s85 = sphi 0, %s85
    %s87 = sphi 0, %s85
    %s88 = sphi 0, %s87
    %s102 = sphi 0, %s88
    %s106 = sphi 0, %s106
    %s108 = sphi 0, %s106
    %s109 = sphi 0, %s108
    %s123 = sphi 0, %s109
    %s127 = sphi 0, %s127
    %s129 = sphi 0, %s127
    %s130 = sphi 0, %s129
    %s144 = sphi 0, %s130
    %s148 = sphi 0, %s148
    %s150 = sphi 0, %s148
    %s151 = sphi 0, %s150
    %s165 = sphi 0, %s151
    %s169 = sphi 0, %s169
    %s171 = sphi 0, %s169
    %s172 = sphi 0, %s171
    %s186 = sphi 0, %s172
    %s194 = sphi 0, %s196
    %s197 = sphi 0, %s194
    %s198 = sphi 0, %s197
    %s214 = sphi 0, %s198
    %s222 = sphi 0, %s224
    %s225 = sphi 0, %s222
    %s226 = sphi 0, %s225
    %s242 = sphi 0, %s226
    %s250 = sphi 0, %s252
    %s253 = sphi 0, %s250
    %s254 = sphi 0, %s253
    %s270 = sphi 0, %s254
  $region4: #{self_attention.2} parent=0 // loop_header_branch
    %19 = sbr.rel (%p17) target = $region8
  $region5: #{self_attention.2} parent=0 // loop_body
    %s21 = ssub.s32 %s16, 1
    %s22 = ssub.s32 %s16, 2
    %s29 = sadd.s32 1, %s24
    %p30 = scmp.ge.s32.totalorder %s29, 1
    %s31 = scalar_select %p30, 0, %s29
    %s32 = sadd.s32 1, %s23
    %s33 = scalar_select %p30, %s32, %s23
    %p34 = scmp.ge.s32.totalorder %s33, 2
    %s35 = scalar_select %p34, 0, %s33
    %s36 = ssub.s32 %s23, %s35
    %s37 = ssub.s32 %s24, %s31
    %s38 = sor.u32 %s36, %s37
    %p39 = scmp.eq.s32.totalorder %s38, 0
    %s41 = sadd.s32 %s40, 1
    %s42 = scalar_select %p39, %s40, %s41
    %p45 = pneg %p39
    %p46 = scmp.eq.s32.totalorder %s16, 1
    %p47 = por %p45, %p46
    %p48 = scmp.ne.s32.totalorder %s40, %s43
    %p49 = scmp.eq.s32.totalorder %s16, 0
    %p50 = por %p48, %p49
    %p51 = scmp.ne.s32.totalorder %s40, %s43
    %p52 = scmp.eq.s32.totalorder %s21, 1
    %p53 = por %p51, %p52
    %p54 = scmp.ne.s32.totalorder %s43, %s44
    %p55 = scmp.eq.s32.totalorder %s21, 0
    %p56 = por %p54, %p55
    %p57 = scmp.ne.s32.totalorder %s43, %s44
    %p58 = scmp.eq.s32.totalorder %s22, 1
    %p59 = por %p57, %p58
    %p61 = scmp.ne.s32.totalorder %s44, %s60
    %p62 = scmp.eq.s32.totalorder %s22, 0
    %p63 = por %p61, %p62
    %s65 = sadd.s32 %s64, 1
    %p68 = scmp.eq.s32.totalorder %s16, 1
    %p69 = scmp.ne.s32.totalorder %s64, %s66
    %p70 = scmp.eq.s32.totalorder %s16, 0
    %p71 = por %p69, %p70
    %p72 = scmp.ne.s32.totalorder %s64, %s66
    %p73 = scmp.eq.s32.totalorder %s21, 1
    %p74 = por %p72, %p73
    %p75 = scmp.ne.s32.totalorder %s66, %s67
    %p76 = scmp.eq.s32.totalorder %s21, 0
    %p77 = por %p75, %p76
    %p78 = scmp.ne.s32.totalorder %s66, %s67
    %p79 = scmp.eq.s32.totalorder %s22, 1
    %p80 = por %p78, %p79
    %p82 = scmp.ne.s32.totalorder %s67, %s81
    %p83 = scmp.eq.s32.totalorder %s22, 0
    %p84 = por %p82, %p83
    %s86 = sadd.s32 %s85, 1
    %p89 = scmp.eq.s32.totalorder %s16, 1
    %p90 = scmp.ne.s32.totalorder %s85, %s87
    %p91 = scmp.eq.s32.totalorder %s16, 0
    %p92 = por %p90, %p91
    %p93 = scmp.ne.s32.totalorder %s85, %s87
    %p94 = scmp.eq.s32.totalorder %s21, 1
    %p95 = por %p93, %p94
    %p96 = scmp.ne.s32.totalorder %s87, %s88
    %p97 = scmp.eq.s32.totalorder %s21, 0
    %p98 = por %p96, %p97
    %p99 = scmp.ne.s32.totalorder %s87, %s88
    %p100 = scmp.eq.s32.totalorder %s22, 1
    %p101 = por %p99, %p100
    %p103 = scmp.ne.s32.totalorder %s88, %s102
    %p104 = scmp.eq.s32.totalorder %s22, 0
    %p105 = por %p103, %p104
    %s107 = sadd.s32 %s106, 1
    %p110 = scmp.eq.s32.totalorder %s16, 1
    %p111 = scmp.ne.s32.totalorder %s106, %s108
    %p112 = scmp.eq.s32.totalorder %s16, 0
    %p113 = por %p111, %p112
    %p114 = scmp.ne.s32.totalorder %s106, %s108
    %p115 = scmp.eq.s32.totalorder %s21, 1
    %p116 = por %p114, %p115
    %p117 = scmp.ne.s32.totalorder %s108, %s109
    %p118 = scmp.eq.s32.totalorder %s21, 0
    %p119 = por %p117, %p118
    %p120 = scmp.ne.s32.totalorder %s108, %s109
    %p121 = scmp.eq.s32.totalorder %s22, 1
    %p122 = por %p120, %p121
    %p124 = scmp.ne.s32.totalorder %s109, %s123
    %p125 = scmp.eq.s32.totalorder %s22, 0
    %p126 = por %p124, %p125
    %s128 = sadd.s32 %s127, 1
    %p131 = scmp.eq.s32.totalorder %s16, 1
    %p132 = scmp.ne.s32.totalorder %s127, %s129
    %p133 = scmp.eq.s32.totalorder %s16, 0
    %p134 = por %p132, %p133
    %p135 = scmp.ne.s32.totalorder %s127, %s129
    %p136 = scmp.eq.s32.totalorder %s21, 1
    %p137 = por %p135, %p136
    %p138 = scmp.ne.s32.totalorder %s129, %s130
    %p139 = scmp.eq.s32.totalorder %s21, 0
    %p140 = por %p138, %p139
    %p141 = scmp.ne.s32.totalorder %s129, %s130
    %p142 = scmp.eq.s32.totalorder %s22, 1
    %p143 = por %p141, %p142
    %p145 = scmp.ne.s32.totalorder %s130, %s144
    %p146 = scmp.eq.s32.totalorder %s22, 0
    %p147 = por %p145, %p146
    %s149 = sadd.s32 %s148, 1
    %p152 = scmp.eq.s32.totalorder %s16, 1
    %p153 = scmp.ne.s32.totalorder %s148, %s150
    %p154 = scmp.eq.s32.totalorder %s16, 0
    %p155 = por %p153, %p154
    %p156 = scmp.ne.s32.totalorder %s148, %s150
    %p157 = scmp.eq.s32.totalorder %s21, 1
    %p158 = por %p156, %p157
    %p159 = scmp.ne.s32.totalorder %s150, %s151
    %p160 = scmp.eq.s32.totalorder %s21, 0
    %p161 = por %p159, %p160
    %p162 = scmp.ne.s32.totalorder %s150, %s151
    %p163 = scmp.eq.s32.totalorder %s22, 1
    %p164 = por %p162, %p163
    %p166 = scmp.ne.s32.totalorder %s151, %s165
    %p167 = scmp.eq.s32.totalorder %s22, 0
    %p168 = por %p166, %p167
    %s170 = sadd.s32 %s169, 1
    %p173 = scmp.eq.s32.totalorder %s16, 1
    %p174 = scmp.ne.s32.totalorder %s169, %s171
    %p175 = scmp.eq.s32.totalorder %s16, 0
    %p176 = por %p174, %p175
    %p177 = scmp.ne.s32.totalorder %s169, %s171
    %p178 = scmp.eq.s32.totalorder %s21, 1
    %p179 = por %p177, %p178
    %p180 = scmp.ne.s32.totalorder %s171, %s172
    %p181 = scmp.eq.s32.totalorder %s21, 0
    %p182 = por %p180, %p181
    %p183 = scmp.ne.s32.totalorder %s171, %s172
    %p184 = scmp.eq.s32.totalorder %s22, 1
    %p185 = por %p183, %p184
    %p187 = scmp.ne.s32.totalorder %s172, %s186
    %p188 = scmp.eq.s32.totalorder %s22, 0
    %p189 = por %p187, %p188
    %s190 = ssub.s32 %s23, %s35
    %s191 = ssub.s32 %s24, %s31
    %s192 = sor.u32 %s190, %s191
    %p193 = scmp.eq.s32.totalorder %s192, 0
    %s195 = sadd.s32 %s194, 1
    %s196 = scalar_select %p193, %s194, %s195
    %p199 = pneg %p193
    %p200 = scmp.eq.s32.totalorder %s16, 1
    %p201 = por %p199, %p200
    %p202 = scmp.ne.s32.totalorder %s194, %s197
    %p203 = scmp.eq.s32.totalorder %s16, 0
    %p204 = por %p202, %p203
    %p205 = scmp.ne.s32.totalorder %s194, %s197
    %p206 = scmp.eq.s32.totalorder %s21, 1
    %p207 = por %p205, %p206
    %p208 = scmp.ne.s32.totalorder %s197, %s198
    %p209 = scmp.eq.s32.totalorder %s21, 0
    %p210 = por %p208, %p209
    %p211 = scmp.ne.s32.totalorder %s197, %s198
    %p212 = scmp.eq.s32.totalorder %s22, 1
    %p213 = por %p211, %p212
    %p215 = scmp.ne.s32.totalorder %s198, %s214
    %p216 = scmp.eq.s32.totalorder %s22, 0
    %p217 = por %p215, %p216
    %s218 = ssub.s32 %s23, %s35
    %s219 = ssub.s32 %s24, %s31
    %s220 = sor.u32 %s218, %s219
    %p221 = scmp.eq.s32.totalorder %s220, 0
    %s223 = sadd.s32 %s222, 1
    %s224 = scalar_select %p221, %s222, %s223
    %p227 = pneg %p221
    %p228 = scmp.eq.s32.totalorder %s16, 1
    %p229 = por %p227, %p228
    %p230 = scmp.ne.s32.totalorder %s222, %s225
    %p231 = scmp.eq.s32.totalorder %s16, 0
    %p232 = por %p230, %p231
    %p233 = scmp.ne.s32.totalorder %s222, %s225
    %p234 = scmp.eq.s32.totalorder %s21, 1
    %p235 = por %p233, %p234
    %p236 = scmp.ne.s32.totalorder %s225, %s226
    %p237 = scmp.eq.s32.totalorder %s21, 0
    %p238 = por %p236, %p237
    %p239 = scmp.ne.s32.totalorder %s225, %s226
    %p240 = scmp.eq.s32.totalorder %s22, 1
    %p241 = por %p239, %p240
    %p243 = scmp.ne.s32.totalorder %s226, %s242
    %p244 = scmp.eq.s32.totalorder %s22, 0
    %p245 = por %p243, %p244
    %s246 = ssub.s32 %s23, %s35
    %s247 = ssub.s32 %s24, %s31
    %s248 = sor.u32 %s246, %s247
    %p249 = scmp.eq.s32.totalorder %s248, 0
    %s251 = sadd.s32 %s250, 1
    %s252 = scalar_select %p249, %s250, %s251
    %p255 = pneg %p249
    %p256 = scmp.eq.s32.totalorder %s16, 1
    %p257 = por %p255, %p256
    %p258 = scmp.ne.s32.totalorder %s250, %s253
    %p259 = scmp.eq.s32.totalorder %s16, 0
    %p260 = por %p258, %p259
    %p261 = scmp.ne.s32.totalorder %s250, %s253
    %p262 = scmp.eq.s32.totalorder %s21, 1
    %p263 = por %p261, %p262
    %p264 = scmp.ne.s32.totalorder %s253, %s254
    %p265 = scmp.eq.s32.totalorder %s21, 0
    %p266 = por %p264, %p265
    %p267 = scmp.ne.s32.totalorder %s253, %s254
    %p268 = scmp.eq.s32.totalorder %s22, 1
    %p269 = por %p267, %p268
    %p271 = scmp.ne.s32.totalorder %s254, %s270
    %p272 = scmp.eq.s32.totalorder %s22, 0
    %p273 = por %p271, %p272
    %p274 = scmp.le.s32.totalorder 1, %s16
    %p275 = scmp.lt.s32.totalorder %s16, 3
    %p276 = pnand %p274, %p275
    %p277 = pneg %p276
    // Predicated region
    $region9: #{self_attention.2} parent=5 // pred_check
      _
    $region10: #{self_attention.2} parent=5 // pred_check_branch
      %279 = sbr.rel (%p276) target = $region12
    $region11: #{self_attention.2} parent=5 // pred_region
      %s280 = ssub.s32 %s16, 1
      // Predicated region
      $region13: #{self_attention.2} parent=11 // pred_check
        %p281 = pneg %p77
      $region14: #{self_attention.2} parent=11 // pred_check_branch
        %283 = sbr.rel (%p281) target = $region16
      $region15: #{self_attention.2} parent=11 // pred_region
        _
      $region16: #{self_attention.2} parent=11 // pred_fallthru
        _
      // Predicated region
      $region17: #{self_attention.2} parent=11 // pred_check
        %p284 = pneg %p98
      $region18: #{self_attention.2} parent=11 // pred_check_branch
        %286 = sbr.rel (%p284) target = $region20
      $region19: #{self_attention.2} parent=11 // pred_region
        _
      $region20: #{self_attention.2} parent=11 // pred_fallthru
        _
      // Predicated region
      $region21: #{self_attention.2} parent=11 // pred_check
        %p287 = pneg %p119
      $region22: #{self_attention.2} parent=11 // pred_check_branch
        %289 = sbr.rel (%p287) target = $region24
      $region23: #{self_attention.2} parent=11 // pred_region
        _
      $region24: #{self_attention.2} parent=11 // pred_fallthru
        _
      // Predicated region
      $region25: #{self_attention.2} parent=11 // pred_check
        %p290 = pneg %p140
      $region26: #{self_attention.2} parent=11 // pred_check_branch
        %292 = sbr.rel (%p290) target = $region28
      $region27: #{self_attention.2} parent=11 // pred_region
        _
      $region28: #{self_attention.2} parent=11 // pred_fallthru
        _
      // Predicated region
      $region29: #{self_attention.2} parent=11 // pred_check
        %p293 = pneg %p161
      $region30: #{self_attention.2} parent=11 // pred_check_branch
        %295 = sbr.rel (%p293) target = $region32
      $region31: #{self_attention.2} parent=11 // pred_region
        _
      $region32: #{self_attention.2} parent=11 // pred_fallthru
        _
      // Predicated region
      $region33: #{self_attention.2} parent=11 // pred_check
        %p296 = pneg %p182
      $region34: #{self_attention.2} parent=11 // pred_check_branch
        %298 = sbr.rel (%p296) target = $region36
      $region35: #{self_attention.2} parent=11 // pred_region
        _
      $region36: #{self_attention.2} parent=11 // pred_fallthru
        _
    $region12: #{self_attention.2} parent=5 // pred_fallthru
      _
    %p299 = scmp.lt.s32.totalorder %s16, 2
    // Predicated region
    $region37: #{self_attention.2} parent=5 // pred_check
      %p300 = pneg %p299
    $region38: #{self_attention.2} parent=5 // pred_check_branch
      %302 = sbr.rel (%p300) target = $region40
    $region39: #{self_attention.2} parent=5 // pred_region
      // Predicated region
      $region41: #{self_attention.2} parent=39 // pred_check
        %p303 = pneg %p50
      $region42: #{self_attention.2} parent=39 // pred_check_branch
        %305 = sbr.rel (%p303) target = $region44
      $region43: #{self_attention.2} parent=39 // pred_region
        %s306 = smul.u32 8, %s24
        %p307 = scmp.lt.s32.totalorder %s23, 1
        %s308 = scalar_select %p307, %s23, 1
        %p309 = scmp.lt.s32.totalorder %s306, 7
        %s310 = scalar_select %p309, %s306, 7
        %s311 = smul.addr %s308, 8
        %s312 = sadd.s32 %s310, %s311
        %s313 = smul.addr %s312, 8
        %s314 = scalar_lea.vmem %s0, %s313
        %s315 = smul.u32 8, %s24
      $region44: #{self_attention.2} parent=39 // pred_fallthru
        _
    $region40: #{self_attention.2} parent=5 // pred_fallthru
      _
    %p316 = scmp.le.s32.totalorder 1, %s16
    %p317 = scmp.lt.s32.totalorder %s16, 3
    %p318 = pnand %p316, %p317
    %p319 = pneg %p318
    // Predicated region
    $region45: #{self_attention.2} parent=5 // pred_check
      _
    $region46: #{self_attention.2} parent=5 // pred_check_branch
      %321 = sbr.rel (%p318) target = $region48
    $region47: #{self_attention.2} parent=5 // pred_region
      %s322 = ssub.s32 %s16, 1
      %s323 = smul.u32 8, %s26
      %p324 = scmp.lt.s32.totalorder %s25, 1
      %s325 = scalar_select %p324, %s25, 1
      %p326 = scmp.lt.s32.totalorder %s323, 7
      %s327 = scalar_select %p326, %s323, 7
      %s328 = smul.addr %s325, 8
      %s329 = sadd.s32 %s327, %s328
      %s330 = smul.addr %s329, 8
      %s331 = scalar_lea.vmem %s0, %s330
      %p332 = pneg %p56
      %p333 = pneg %p53
      %p334 = pneg %p77
      %p335 = pneg %p74
      %p336 = pneg %p98
      %p337 = pneg %p95
      %p338 = pneg %p119
      %p339 = pneg %p116
      %p340 = pneg %p140
      %p341 = pneg %p137
      %p342 = pneg %p161
      %p343 = pneg %p158
      %p344 = pneg %p182
      %p345 = pneg %p179
      %p346 = pneg %p210
      %p347 = pneg %p207
      %s348 = smul.u32 8, %s26
      %p349 = scmp.lt.s32.totalorder %s25, 1
      %s350 = scalar_select %p349, %s25, 1
      %p351 = scmp.lt.s32.totalorder %s348, 7
      %s352 = scalar_select %p351, %s348, 7
      %s353 = smul.addr %s350, 8
      %s354 = sadd.s32 %s352, %s353
      %s355 = smul.addr %s354, 8
      %s356 = scalar_lea.vmem %s7, %s355
      %p357 = pneg %p238
      %p358 = pneg %p235
      %s359 = smul.u32 8, %s26
      %p360 = scmp.lt.s32.totalorder %s25, 1
      %s361 = scalar_select %p360, %s25, 1
      %p362 = scmp.lt.s32.totalorder %s359, 7
      %s363 = scalar_select %p362, %s359, 7
      %s364 = smul.addr %s361, 8
      %s365 = sadd.s32 %s363, %s364
      %s366 = smul.addr %s365, 8
      %s367 = scalar_lea.vmem %s8, %s366
      %p368 = pneg %p266
      %p369 = pneg %p263
      %s370 = smul.u32 8, %s26
      %p371 = scmp.lt.s32.totalorder %s25, 1
      %s372 = scalar_select %p371, %s25, 1
      %p373 = scmp.lt.s32.totalorder %s370, 7
      %s374 = scalar_select %p373, %s370, 7
      %s375 = smul.addr %s372, 8
      %s376 = sadd.s32 %s374, %s375
      %s377 = smul.addr %s376, 8
      %s378 = scalar_lea.vmem %s9, %s377
      %s379 = smul.u32 8, %s26
      %p380 = scmp.lt.s32.totalorder %s25, 1
      %s381 = scalar_select %p380, %s25, 1
      %p382 = scmp.lt.s32.totalorder %s379, 7
      %s383 = scalar_select %p382, %s379, 7
      %s384 = smul.addr %s381, 8
      %s385 = sadd.s32 %s383, %s384
      %s386 = smul.addr %s385, 8
      %s387 = scalar_lea.vmem %s0, %s386
      %s388 = smul.u32 8, %s26
      %s389 = smul.u32 8, %s26
      %p390 = scmp.lt.s32.totalorder %s25, 1
      %s391 = scalar_select %p390, %s25, 1
      %p392 = scmp.lt.s32.totalorder %s389, 7
      %s393 = scalar_select %p392, %s389, 7
      %s394 = smul.addr %s391, 8
      %s395 = sadd.s32 %s393, %s394
      %s396 = smul.addr %s395, 8
      %s397 = scalar_lea.vmem %s7, %s396
      %s398 = smul.u32 8, %s26
      %s399 = smul.u32 8, %s26
      %p400 = scmp.lt.s32.totalorder %s25, 1
      %s401 = scalar_select %p400, %s25, 1
      %p402 = scmp.lt.s32.totalorder %s399, 7
      %s403 = scalar_select %p402, %s399, 7
      %s404 = smul.addr %s401, 8
      %s405 = sadd.s32 %s403, %s404
      %s406 = smul.addr %s405, 8
      %s407 = scalar_lea.vmem %s8, %s406
      %s408 = smul.u32 8, %s26
      %s409 = smul.u32 8, %s26
      %p410 = scmp.lt.s32.totalorder %s25, 1
      %s411 = scalar_select %p410, %s25, 1
      %p412 = scmp.lt.s32.totalorder %s409, 7
      %s413 = scalar_select %p412, %s409, 7
      %s414 = smul.addr %s411, 8
      %s415 = sadd.s32 %s413, %s414
      %s416 = smul.addr %s415, 8
      %s417 = scalar_lea.vmem %s9, %s416
      %s418 = smul.u32 8, %s26
      %v419 = vld [vmem:[%s387] sm:$0xff]
      %v420 = vld [vmem:[%s387 + $0x8] sm:$0xff]
      %v421 = vld [vmem:[%s387 + $0x10] sm:$0xff]
      %v422 = vld [vmem:[%s387 + $0x18] sm:$0xff]
      %v423 = vld [vmem:[%s387 + $0x20] sm:$0xff]
      %v424 = vld [vmem:[%s387 + $0x28] sm:$0xff]
      %v425 = vld [vmem:[%s387 + $0x30] sm:$0xff]
      %v426 = vld [vmem:[%s387 + $0x38] sm:$0xff]
      %v427 = vld [vmem:[%s1] sm:$0xff]
      %v428 = vld [vmem:[%s1 + $0x8] sm:$0xff]
      %v429 = vld [vmem:[%s1 + $0x10] sm:$0xff]
      %v430 = vld [vmem:[%s1 + $0x18] sm:$0xff]
      %v431 = vld [vmem:[%s4] sm:$0x1]
      %v433 = vlaneseq
      %v434 = vshrl.u32 %v433, 7
      %v435 = vsub.s32 0, %v434
      %v436 = vrot.slane %v431, %v435
      %vm438 = vcmask 261120
      %v440 = vsel %vm438, %v419, 0
      %v443 = vsel %vm438, %v420, 0
      %v446 = vsel %vm438, %v421, 0
      %v449 = vsel %vm438, %v422, 0
      %v452 = vsel %vm438, %v423, 0
      %v455 = vsel %vm438, %v424, 0
      %v458 = vsel %vm438, %v425, 0
      %v461 = vsel %vm438, %v426, 0
      %463 = vmatprep.subr.mxu0 0.0
      %464 = vmatpush1.msra.mxu0 %v427
      %465 = vmatprep.subr.mxu0 0.0
      %466 = vmatpush1.msra.mxu0 %v428
      %467 = vmatprep.subr.mxu0 0.0
      %468 = vmatpush1.msra.mxu0 %v429
      %469 = vmatprep.subr.mxu0 0.0
      %470 = vmatpush1.msra.mxu0 %v430
      %471 = vmatprep.subr.mxu0 0.0
      %472 = vmatpush1.msra.mxu0 0.0
      %473 = vmatprep.subr.mxu0 0.0
      %474 = vmatpush1.msra.mxu0 0.0
      %475 = vmatprep.subr.mxu0 0.0
      %476 = vmatpush1.msra.mxu0 0.0
      %477 = vmatprep.subr.mxu0 0.0
      %478 = vmatpush1.msra.mxu0 0.0
      %479 = vmatprep.subr.mxu0 0.0
      %480 = vmatpush1.msra.mxu0 0.0
      %481 = vmatprep.subr.mxu0 0.0
      %482 = vmatpush1.msra.mxu0 0.0
      %483 = vmatprep.subr.mxu0 0.0
      %484 = vmatpush1.msra.mxu0 0.0
      %485 = vmatprep.subr.mxu0 0.0
      %486 = vmatpush1.msra.mxu0 0.0
      %487 = vmatprep.subr.mxu0 0.0
      %488 = vmatpush1.msra.mxu0 0.0
      %489 = vmatprep.subr.mxu0 0.0
      %490 = vmatpush1.msra.mxu0 0.0
      %491 = vmatprep.subr.mxu0 0.0
      %492 = vmatpush1.msra.mxu0 0.0
      %493 = vmatprep.subr.mxu0 0.0
      %494 = vmatpush1.msra.mxu0 0.0
      %495 = vmatprep.subr.mxu0 0.0
      %496 = vmatpush1.msra.mxu0 0.0
      %497 = vmatprep.subr.mxu0 0.0
      %498 = vmatpush1.msra.mxu0 0.0
      %499 = vmatprep.subr.mxu0 0.0
      %500 = vmatpush1.msra.mxu0 0.0
      %501 = vmatprep.subr.mxu0 0.0
      %502 = vmatpush1.msra.mxu0 0.0
      %503 = vmatprep.subr.mxu0 0.0
      %504 = vmatpush1.msra.mxu0 0.0
      %505 = vmatprep.subr.mxu0 0.0
      %506 = vmatpush1.msra.mxu0 0.0
      %507 = vmatprep.subr.mxu0 0.0
      %508 = vmatpush1.msra.mxu0 0.0
      %509 = vmatprep.subr.mxu0 0.0
      %510 = vmatpush1.msra.mxu0 0.0
      %511 = vmatprep.subr.mxu0 0.0
      %512 = vmatpush1.msra.mxu0 0.0
      %513 = vmatprep.subr.mxu0 0.0
      %514 = vmatpush1.msra.mxu0 0.0
      %515 = vmatprep.subr.mxu0 0.0
      %516 = vmatpush1.msra.mxu0 0.0
      %517 = vmatprep.subr.mxu0 0.0
      %518 = vmatpush1.msra.mxu0 0.0
      %519 = vmatprep.subr.mxu0 0.0
      %520 = vmatpush1.msra.mxu0 0.0
      %521 = vmatprep.subr.mxu0 0.0
      %522 = vmatpush1.msra.mxu0 0.0
      %523 = vmatprep.subr.mxu0 0.0
      %524 = vmatpush1.msra.mxu0 0.0
      %525 = vmatprep.subr.mxu0 0.0
      %526 = vmatpush1.msra.mxu0 0.0
      %527 = vmatprep.mubr.f32.mxu0 0.0
      %528 = vmatmul.mubr.f32.gmra.mrb[0].mxu0 %v440
      %v529 = vpop.f32.mrb[0].mxu0
      %v530 = vadd.f32 %v436, %v529
      %v531 = vpop.f32.mrb[0].mxu0
      %532 = vmatprep.mubr.f32.mxu0 0.0
      %533 = vmatmul.mubr.f32.gmra.mrb[0].mxu0 %v443
      %v534 = vpop.f32.mrb[0].mxu0
      %v535 = vadd.f32 %v436, %v534
      %v536 = vpop.f32.mrb[0].mxu0
      %537 = vmatprep.mubr.f32.mxu0 0.0
      %538 = vmatmul.mubr.f32.gmra.mrb[0].mxu0 %v446
      %v539 = vpop.f32.mrb[0].mxu0
      %v540 = vadd.f32 %v436, %v539
      %v541 = vpop.f32.mrb[0].mxu0
      %542 = vmatprep.mubr.f32.mxu0 0.0
      %543 = vmatmul.mubr.f32.gmra.mrb[0].mxu0 %v449
      %v544 = vpop.f32.mrb[0].mxu0
      %v545 = vadd.f32 %v436, %v544
      %v546 = vpop.f32.mrb[0].mxu0
      %547 = vmatprep.mubr.f32.mxu0 0.0
      %548 = vmatmul.mubr.f32.gmra.mrb[0].mxu0 %v452
      %v549 = vpop.f32.mrb[0].mxu0
      %v550 = vadd.f32 %v436, %v549
      %v551 = vpop.f32.mrb[0].mxu0
      %552 = vmatprep.mubr.f32.mxu0 0.0
      %553 = vmatmul.mubr.f32.gmra.mrb[0].mxu0 %v455
      %v554 = vpop.f32.mrb[0].mxu0
      %v555 = vadd.f32 %v436, %v554
      %v556 = vpop.f32.mrb[0].mxu0
      %557 = vmatprep.mubr.f32.mxu0 0.0
      %558 = vmatmul.mubr.f32.gmra.mrb[0].mxu0 %v458
      %v559 = vpop.f32.mrb[0].mxu0
      %v560 = vadd.f32 %v436, %v559
      %v561 = vpop.f32.mrb[0].mxu0
      %562 = vmatprep.mubr.f32.mxu0 0.0
      %563 = vmatmul.mubr.f32.gmra.mrb[0].mxu0 %v461
      %v564 = vpop.f32.mrb[0].mxu0
      %v565 = vadd.f32 %v436, %v564
      %v566 = vpop.f32.mrb[0].mxu0
      %567 = vdwg.mxu0
      %v568 = vld [vmem:[%s2] sm:$0xff]
      %v569 = vld [vmem:[%s2 + $0x8] sm:$0xff]
      %v570 = vld [vmem:[%s2 + $0x10] sm:$0xff]
      %v571 = vld [vmem:[%s2 + $0x18] sm:$0xff]
      %v572 = vld [vmem:[%s5] sm:$0x1]
      %v574 = vlaneseq
      %v575 = vshrl.u32 %v574, 7
      %v576 = vsub.s32 0, %v575
      %v577 = vrot.slane %v572, %v576
      %579 = vmatprep.subr.mxu0 0.0
      %580 = vmatpush1.msra.mxu0 %v568
      %581 = vmatprep.subr.mxu0 0.0
      %582 = vmatpush1.msra.mxu0 %v569
      %583 = vmatprep.subr.mxu0 0.0
      %584 = vmatpush1.msra.mxu0 %v570
      %585 = vmatprep.subr.mxu0 0.0
      %586 = vmatpush1.msra.mxu0 %v571
      %587 = vmatprep.subr.mxu0 0.0
      %588 = vmatpush1.msra.mxu0 0.0
      %589 = vmatprep.subr.mxu0 0.0
      %590 = vmatpush1.msra.mxu0 0.0
      %591 = vmatprep.subr.mxu0 0.0
      %592 = vmatpush1.msra.mxu0 0.0
      %593 = vmatprep.subr.mxu0 0.0
      %594 = vmatpush1.msra.mxu0 0.0
      %595 = vmatprep.subr.mxu0 0.0
      %596 = vmatpush1.msra.mxu0 0.0
      %597 = vmatprep.subr.mxu0 0.0
      %598 = vmatpush1.msra.mxu0 0.0
      %599 = vmatprep.subr.mxu0 0.0
      %600 = vmatpush1.msra.mxu0 0.0
      %601 = vmatprep.subr.mxu0 0.0
      %602 = vmatpush1.msra.mxu0 0.0
      %603 = vmatprep.subr.mxu0 0.0
      %604 = vmatpush1.msra.mxu0 0.0
      %605 = vmatprep.subr.mxu0 0.0
      %606 = vmatpush1.msra.mxu0 0.0
      %607 = vmatprep.subr.mxu0 0.0
      %608 = vmatpush1.msra.mxu0 0.0
      %609 = vmatprep.subr.mxu0 0.0
      %610 = vmatpush1.msra.mxu0 0.0
      %611 = vmatprep.subr.mxu0 0.0
      %612 = vmatpush1.msra.mxu0 0.0
      %613 = vmatprep.subr.mxu0 0.0
      %614 = vmatpush1.msra.mxu0 0.0
      %615 = vmatprep.subr.mxu0 0.0
      %616 = vmatpush1.msra.mxu0 0.0
      %617 = vmatprep.subr.mxu0 0.0
      %618 = vmatpush1.msra.mxu0 0.0
      %619 = vmatprep.subr.mxu0 0.0
      %620 = vmatpush1.msra.mxu0 0.0
      %621 = vmatprep.subr.mxu0 0.0
      %622 = vmatpush1.msra.mxu0 0.0
      %623 = vmatprep.subr.mxu0 0.0
      %624 = vmatpush1.msra.mxu0 0.0
      %625 = vmatprep.subr.mxu0 0.0
      %626 = vmatpush1.msra.mxu0 0.0
      %627 = vmatprep.subr.mxu0 0.0
      %628 = vmatpush1.msra.mxu0 0.0
      %629 = vmatprep.subr.mxu0 0.0
      %630 = vmatpush1.msra.mxu0 0.0
      %631 = vmatprep.subr.mxu0 0.0
      %632 = vmatpush1.msra.mxu0 0.0
      %633 = vmatprep.subr.mxu0 0.0
      %634 = vmatpush1.msra.mxu0 0.0
      %635 = vmatprep.subr.mxu0 0.0
      %636 = vmatpush1.msra.mxu0 0.0
      %637 = vmatprep.subr.mxu0 0.0
      %638 = vmatpush1.msra.mxu0 0.0
      %639 = vmatprep.subr.mxu0 0.0
      %640 = vmatpush1.msra.mxu0 0.0
      %641 = vmatprep.subr.mxu0 0.0
      %642 = vmatpush1.msra.mxu0 0.0
      %643 = vmatprep.mubr.f32.mxu0 0.0
      %644 = vmatmul.mubr.f32.gmra.mrb[0].mxu0 %v440
      %v645 = vpop.f32.mrb[0].mxu0
      %v646 = vadd.f32 %v577, %v645
      %v647 = vpop.f32.mrb[0].mxu0
      %648 = vmatprep.mubr.f32.mxu0 0.0
      %649 = vmatmul.mubr.f32.gmra.mrb[0].mxu0 %v443
      %v650 = vpop.f32.mrb[0].mxu0
      %v651 = vadd.f32 %v577, %v650
      %v652 = vpop.f32.mrb[0].mxu0
      %653 = vmatprep.mubr.f32.mxu0 0.0
      %654 = vmatmul.mubr.f32.gmra.mrb[0].mxu0 %v446
      %v655 = vpop.f32.mrb[0].mxu0
      %v656 = vadd.f32 %v577, %v655
      %v657 = vpop.f32.mrb[0].mxu0
      %658 = vmatprep.mubr.f32.mxu0 0.0
      %659 = vmatmul.mubr.f32.gmra.mrb[0].mxu0 %v449
      %v660 = vpop.f32.mrb[0].mxu0
      %v661 = vadd.f32 %v577, %v660
      %v662 = vpop.f32.mrb[0].mxu0
      %663 = vmatprep.mubr.f32.mxu0 0.0
      %664 = vmatmul.mubr.f32.gmra.mrb[0].mxu0 %v452
      %v665 = vpop.f32.mrb[0].mxu0
      %v666 = vadd.f32 %v577, %v665
      %v667 = vpop.f32.mrb[0].mxu0
      %668 = vmatprep.mubr.f32.mxu0 0.0
      %669 = vmatmul.mubr.f32.gmra.mrb[0].mxu0 %v455
      %v670 = vpop.f32.mrb[0].mxu0
      %v671 = vadd.f32 %v577, %v670
      %v672 = vpop.f32.mrb[0].mxu0
      %673 = vmatprep.mubr.f32.mxu0 0.0
      %674 = vmatmul.mubr.f32.gmra.mrb[0].mxu0 %v458
      %v675 = vpop.f32.mrb[0].mxu0
      %v676 = vadd.f32 %v577, %v675
      %v677 = vpop.f32.mrb[0].mxu0
      %678 = vmatprep.mubr.f32.mxu0 0.0
      %679 = vmatmul.mubr.f32.gmra.mrb[0].mxu0 %v461
      %v680 = vpop.f32.mrb[0].mxu0
      %v681 = vadd.f32 %v577, %v680
      %v682 = vpop.f32.mrb[0].mxu0
      %683 = vdwg.mxu0
      %v684 = vld [vmem:[%s3] sm:$0xff]
      %v685 = vld [vmem:[%s3 + $0x8] sm:$0xff]
      %v686 = vld [vmem:[%s3 + $0x10] sm:$0xff]
      %v687 = vld [vmem:[%s3 + $0x18] sm:$0xff]
      %v688 = vld [vmem:[%s6] sm:$0x1]
      %v690 = vlaneseq
      %v691 = vshrl.u32 %v690, 7
      %v692 = vsub.s32 0, %v691
      %v693 = vrot.slane %v688, %v692
      %695 = vmatprep.subr.mxu0 0.0
      %696 = vmatpush1.msra.mxu0 %v684
      %697 = vmatprep.subr.mxu0 0.0
      %698 = vmatpush1.msra.mxu0 %v685
      %699 = vmatprep.subr.mxu0 0.0
      %700 = vmatpush1.msra.mxu0 %v686
      %701 = vmatprep.subr.mxu0 0.0
      %702 = vmatpush1.msra.mxu0 %v687
      %703 = vmatprep.subr.mxu0 0.0
      %704 = vmatpush1.msra.mxu0 0.0
      %705 = vmatprep.subr.mxu0 0.0
      %706 = vmatpush1.msra.mxu0 0.0
      %707 = vmatprep.subr.mxu0 0.0
      %708 = vmatpush1.msra.mxu0 0.0
      %709 = vmatprep.subr.mxu0 0.0
      %710 = vmatpush1.msra.mxu0 0.0
      %711 = vmatprep.subr.mxu0 0.0
      %712 = vmatpush1.msra.mxu0 0.0
      %713 = vmatprep.subr.mxu0 0.0
      %714 = vmatpush1.msra.mxu0 0.0
      %715 = vmatprep.subr.mxu0 0.0
      %716 = vmatpush1.msra.mxu0 0.0
      %717 = vmatprep.subr.mxu0 0.0
      %718 = vmatpush1.msra.mxu0 0.0
      %719 = vmatprep.subr.mxu0 0.0
      %720 = vmatpush1.msra.mxu0 0.0
      %721 = vmatprep.subr.mxu0 0.0
      %722 = vmatpush1.msra.mxu0 0.0
      %723 = vmatprep.subr.mxu0 0.0
      %724 = vmatpush1.msra.mxu0 0.0
      %725 = vmatprep.subr.mxu0 0.0
      %726 = vmatpush1.msra.mxu0 0.0
      %727 = vmatprep.subr.mxu0 0.0
      %728 = vmatpush1.msra.mxu0 0.0
      %729 = vmatprep.subr.mxu0 0.0
      %730 = vmatpush1.msra.mxu0 0.0
      %731 = vmatprep.subr.mxu0 0.0
      %732 = vmatpush1.msra.mxu0 0.0
      %733 = vmatprep.subr.mxu0 0.0
      %734 = vmatpush1.msra.mxu0 0.0
      %735 = vmatprep.subr.mxu0 0.0
      %736 = vmatpush1.msra.mxu0 0.0
      %737 = vmatprep.subr.mxu0 0.0
      %738 = vmatpush1.msra.mxu0 0.0
      %739 = vmatprep.subr.mxu0 0.0
      %740 = vmatpush1.msra.mxu0 0.0
      %741 = vmatprep.subr.mxu0 0.0
      %742 = vmatpush1.msra.mxu0 0.0
      %743 = vmatprep.subr.mxu0 0.0
      %744 = vmatpush1.msra.mxu0 0.0
      %745 = vmatprep.subr.mxu0 0.0
      %746 = vmatpush1.msra.mxu0 0.0
      %747 = vmatprep.subr.mxu0 0.0
      %748 = vmatpush1.msra.mxu0 0.0
      %749 = vmatprep.subr.mxu0 0.0
      %750 = vmatpush1.msra.mxu0 0.0
      %751 = vmatprep.subr.mxu0 0.0
      %752 = vmatpush1.msra.mxu0 0.0
      %753 = vmatprep.subr.mxu0 0.0
      %754 = vmatpush1.msra.mxu0 0.0
      %755 = vmatprep.subr.mxu0 0.0
      %756 = vmatpush1.msra.mxu0 0.0
      %757 = vmatprep.subr.mxu0 0.0
      %758 = vmatpush1.msra.mxu0 0.0
      %759 = vmatprep.mubr.f32.mxu0 0.0
      %760 = vmatmul.mubr.f32.gmra.mrb[0].mxu0 %v440
      %v761 = vpop.f32.mrb[0].mxu0
      %v762 = vadd.f32 %v693, %v761
      %v763 = vpop.f32.mrb[0].mxu0
      %764 = vmatprep.mubr.f32.mxu0 0.0
      %765 = vmatmul.mubr.f32.gmra.mrb[0].mxu0 %v443
      %v766 = vpop.f32.mrb[0].mxu0
      %v767 = vadd.f32 %v693, %v766
      %v768 = vpop.f32.mrb[0].mxu0
      %769 = vmatprep.mubr.f32.mxu0 0.0
      %770 = vmatmul.mubr.f32.gmra.mrb[0].mxu0 %v446
      %v771 = vpop.f32.mrb[0].mxu0
      %v772 = vadd.f32 %v693, %v771
      %v773 = vpop.f32.mrb[0].mxu0
      %774 = vmatprep.mubr.f32.mxu0 0.0
      %775 = vmatmul.mubr.f32.gmra.mrb[0].mxu0 %v449
      %v776 = vpop.f32.mrb[0].mxu0
      %v777 = vadd.f32 %v693, %v776
      %v778 = vpop.f32.mrb[0].mxu0
      %779 = vmatprep.mubr.f32.mxu0 0.0
      %780 = vmatmul.mubr.f32.gmra.mrb[0].mxu0 %v452
      %v781 = vpop.f32.mrb[0].mxu0
      %v782 = vadd.f32 %v693, %v781
      %v783 = vpop.f32.mrb[0].mxu0
      %784 = vmatprep.mubr.f32.mxu0 0.0
      %785 = vmatmul.mubr.f32.gmra.mrb[0].mxu0 %v455
      %v786 = vpop.f32.mrb[0].mxu0
      %v787 = vadd.f32 %v693, %v786
      %v788 = vpop.f32.mrb[0].mxu0
      %789 = vmatprep.mubr.f32.mxu0 0.0
      %790 = vmatmul.mubr.f32.gmra.mrb[0].mxu0 %v458
      %v791 = vpop.f32.mrb[0].mxu0
      %v792 = vadd.f32 %v693, %v791
      %v793 = vpop.f32.mrb[0].mxu0
      %794 = vmatprep.mubr.f32.mxu0 0.0
      %795 = vmatmul.mubr.f32.gmra.mrb[0].mxu0 %v461
      %v796 = vpop.f32.mrb[0].mxu0
      %v797 = vadd.f32 %v693, %v796
      %v798 = vpop.f32.mrb[0].mxu0
      %799 = vdwg.mxu0
      %800 = vst.msk [vmem:[%s397] sm:$0xff] %vm438, %v530
      %801 = vst.msk [vmem:[%s397 + $0x8] sm:$0xff] %vm438, %v535
      %802 = vst.msk [vmem:[%s397 + $0x10] sm:$0xff] %vm438, %v540
      %803 = vst.msk [vmem:[%s397 + $0x18] sm:$0xff] %vm438, %v545
      %804 = vst.msk [vmem:[%s397 + $0x20] sm:$0xff] %vm438, %v550
      %805 = vst.msk [vmem:[%s397 + $0x28] sm:$0xff] %vm438, %v555
      %806 = vst.msk [vmem:[%s397 + $0x30] sm:$0xff] %vm438, %v560
      %807 = vst.msk [vmem:[%s397 + $0x38] sm:$0xff] %vm438, %v565
      %808 = vst.msk [vmem:[%s407] sm:$0xff] %vm438, %v646
      %809 = vst.msk [vmem:[%s407 + $0x8] sm:$0xff] %vm438, %v651
      %810 = vst.msk [vmem:[%s407 + $0x10] sm:$0xff] %vm438, %v656
      %811 = vst.msk [vmem:[%s407 + $0x18] sm:$0xff] %vm438, %v661
      %812 = vst.msk [vmem:[%s407 + $0x20] sm:$0xff] %vm438, %v666
      %813 = vst.msk [vmem:[%s407 + $0x28] sm:$0xff] %vm438, %v671
      %814 = vst.msk [vmem:[%s407 + $0x30] sm:$0xff] %vm438, %v676
      %815 = vst.msk [vmem:[%s407 + $0x38] sm:$0xff] %vm438, %v681
      %816 = vst.msk [vmem:[%s417] sm:$0xff] %vm438, %v762
      %817 = vst.msk [vmem:[%s417 + $0x8] sm:$0xff] %vm438, %v767
      %818 = vst.msk [vmem:[%s417 + $0x10] sm:$0xff] %vm438, %v772
      %819 = vst.msk [vmem:[%s417 + $0x18] sm:$0xff] %vm438, %v777
      %820 = vst.msk [vmem:[%s417 + $0x20] sm:$0xff] %vm438, %v782
      %821 = vst.msk [vmem:[%s417 + $0x28] sm:$0xff] %vm438, %v787
      %822 = vst.msk [vmem:[%s417 + $0x30] sm:$0xff] %vm438, %v792
      %823 = vst.msk [vmem:[%s417 + $0x38] sm:$0xff] %vm438, %v797
      %s824 = smul.u32 8, %s26
      %p825 = scmp.lt.s32.totalorder %s25, 1
      %s826 = scalar_select %p825, %s25, 1
      %p827 = scmp.lt.s32.totalorder %s824, 7
      %s828 = scalar_select %p827, %s824, 7
      %s829 = smul.addr %s826, 8
      %s830 = sadd.s32 %s828, %s829
      %s831 = smul.addr %s830, 8
      %s832 = scalar_lea.vmem %s7, %s831
      %s833 = smul.u32 8, %s26
      %p834 = scmp.lt.s32.totalorder %s25, 1
      %s835 = scalar_select %p834, %s25, 1
      %p836 = scmp.lt.s32.totalorder %s833, 7
      %s837 = scalar_select %p836, %s833, 7
      %s838 = smul.addr %s835, 8
      %s839 = sadd.s32 %s837, %s838
      %s840 = smul.addr %s839, 8
      %s841 = scalar_lea.vmem %s8, %s840
      %s842 = smul.u32 8, %s26
      %p843 = scmp.lt.s32.totalorder %s25, 1
      %s844 = scalar_select %p843, %s25, 1
      %p845 = scmp.lt.s32.totalorder %s842, 7
      %s846 = scalar_select %p845, %s842, 7
      %s847 = smul.addr %s844, 8
      %s848 = sadd.s32 %s846, %s847
      %s849 = smul.addr %s848, 8
      %s850 = scalar_lea.vmem %s9, %s849
      // Predicated region
      $region49: #{self_attention.2} parent=47 // pred_check
        %p851 = pneg %p207
      $region50: #{self_attention.2} parent=47 // pred_check_branch
        %853 = sbr.rel (%p851) target = $region52
      $region51: #{self_attention.2} parent=47 // pred_region
        %s854 = smul.u32 8, %s26
      $region52: #{self_attention.2} parent=47 // pred_fallthru
        _
      // Predicated region
      $region53: #{self_attention.2} parent=47 // pred_check
        %p855 = pneg %p235
      $region54: #{self_attention.2} parent=47 // pred_check_branch
        %857 = sbr.rel (%p855) target = $region56
      $region55: #{self_attention.2} parent=47 // pred_region
        %s858 = smul.u32 8, %s26
      $region56: #{self_attention.2} parent=47 // pred_fallthru
        _
      // Predicated region
      $region57: #{self_attention.2} parent=47 // pred_check
        %p859 = pneg %p263
      $region58: #{self_attention.2} parent=47 // pred_check_branch
        %861 = sbr.rel (%p859) target = $region60
      $region59: #{self_attention.2} parent=47 // pred_region
        %s862 = smul.u32 8, %s26
      $region60: #{self_attention.2} parent=47 // pred_fallthru
        _
    $region48: #{self_attention.2} parent=5 // pred_fallthru
      _
    %p863 = scmp.le.s32.totalorder 2, %s16
    // Predicated region
    $region61: #{self_attention.2} parent=5 // pred_check
      %p864 = pneg %p863
    $region62: #{self_attention.2} parent=5 // pred_check_branch
      %866 = sbr.rel (%p864) target = $region64
    $region63: #{self_attention.2} parent=5 // pred_region
      %s867 = ssub.s32 %s16, 2
      // Predicated region
      $region65: #{self_attention.2} parent=63 // pred_check
        %p868 = pneg %p213
      $region66: #{self_attention.2} parent=63 // pred_check_branch
        %870 = sbr.rel (%p868) target = $region68
      $region67: #{self_attention.2} parent=63 // pred_region
        %s871 = smul.u32 8, %s28
        %p872 = scmp.lt.s32.totalorder %s27, 1
        %s873 = scalar_select %p872, %s27, 1
        %p874 = scmp.lt.s32.totalorder %s871, 7
        %s875 = scalar_select %p874, %s871, 7
        %s876 = smul.addr %s873, 8
        %s877 = sadd.s32 %s875, %s876
        %s878 = smul.addr %s877, 8
        %s879 = scalar_lea.vmem %s7, %s878
      $region68: #{self_attention.2} parent=63 // pred_fallthru
        _
      // Predicated region
      $region69: #{self_attention.2} parent=63 // pred_check
        %p880 = pneg %p241
      $region70: #{self_attention.2} parent=63 // pred_check_branch
        %882 = sbr.rel (%p880) target = $region72
      $region71: #{self_attention.2} parent=63 // pred_region
        %s883 = smul.u32 8, %s28
        %p884 = scmp.lt.s32.totalorder %s27, 1
        %s885 = scalar_select %p884, %s27, 1
        %p886 = scmp.lt.s32.totalorder %s883, 7
        %s887 = scalar_select %p886, %s883, 7
        %s888 = smul.addr %s885, 8
        %s889 = sadd.s32 %s887, %s888
        %s890 = smul.addr %s889, 8
        %s891 = scalar_lea.vmem %s8, %s890
      $region72: #{self_attention.2} parent=63 // pred_fallthru
        _
      // Predicated region
      $region73: #{self_attention.2} parent=63 // pred_check
        %p892 = pneg %p269
      $region74: #{self_attention.2} parent=63 // pred_check_branch
        %894 = sbr.rel (%p892) target = $region76
      $region75: #{self_attention.2} parent=63 // pred_region
        %s895 = smul.u32 8, %s28
        %p896 = scmp.lt.s32.totalorder %s27, 1
        %s897 = scalar_select %p896, %s27, 1
        %p898 = scmp.lt.s32.totalorder %s895, 7
        %s899 = scalar_select %p898, %s895, 7
        %s900 = smul.addr %s897, 8
        %s901 = sadd.s32 %s899, %s900
        %s902 = smul.addr %s901, 8
        %s903 = scalar_lea.vmem %s9, %s902
      $region76: #{self_attention.2} parent=63 // pred_fallthru
        _
    $region64: #{self_attention.2} parent=5 // pred_fallthru
      _
  $region6: #{self_attention.2} parent=0 // loop_footer
    %s20 = sadd.s32 1, %s16
  $region7: #{self_attention.2} parent=0 // loop_footer_branch
    %15 = sbr.rel target = $region3
  $region8: #{self_attention.2} parent=0 // loop_exit
    _

// kernel: self_attention.3
$region0: #{self_attention.3}
  #allocation0 [shape = 'u32[]', space=smem, size = 0x4, offset = 0x4, fixed_abs, tag = 'smem constant byte address 0x4 - core index']
  #allocation1 [shape = 'u32[144,128]{1,0:T(1,128)}', space=vmem, size = 0x12000, scoped, tag = 'internal scratch']
  #allocation2 [shape = 'f32[16,1]{1,0:T(8,128)}', space=vmem, size = 0x2000, scoped, tag = 'scratch operand']
  #allocation3 [shape = 'f32[16,1]{1,0:T(8,128)}', space=vmem, size = 0x2000, scoped, tag = 'scratch operand']
  #allocation4 [shape = 'f32[16,8]{1,0:T(8,128)}', space=vmem, size = 0x2000, scoped, tag = 'scratch operand']
  %s0 = inlined_call_operand.vmem [shape: f32[2,4,64,8], index: 0, kind: input, shape index: {}]
  %s1 = inlined_call_operand.vmem [shape: f32[2,4,64,8], index: 1, kind: input, shape index: {}]
  %s2 = inlined_call_operand.vmem [shape: f32[2,4,64,8], index: 2, kind: input, shape index: {}]
  %s3 = inlined_call_operand.vmem [shape: f32[2,4,64,8], index: 3, kind: output, shape index: {}]
  %s4 = sld [smem:[#allocation0]]
  $region53: #{self_attention.3} parent=0
    _
  %s6 = ssub.s32 1, %s4
  %s7 = scalar_select 0, %s6, %s4
  loop: start=0, step=1, limit=130
  $region2: #{self_attention.3} parent=0 // loop_pre_header
    _
  $region3: #{self_attention.3} parent=0 // loop_header
    %s9 = sphi 0, %s13
    %p10 = scmp.ge.s32.totalorder %s9, 130
    %s16 = sphi 0, %s42
    %s17 = sphi 0, %s38
    %s18 = sphi 0, %s34
    %s19 = sphi 0, %s30
    %s20 = sphi 0, %s16
    %s21 = sphi 0, %s17
    %s22 = sphi 0, %s18
    %s23 = sphi 0, %s19
    %s24 = sphi 0, %s20
    %s25 = sphi 0, %s21
    %s26 = sphi 0, %s22
    %s27 = sphi 0, %s23
    %s49 = sphi 0, %s51
    %s52 = sphi 0, %s49
    %s53 = sphi 0, %s52
    %s69 = sphi 0, %s53
    %s79 = sphi 0, %s81
    %s82 = sphi 0, %s79
    %s83 = sphi 0, %s82
    %s99 = sphi 0, %s83
    %s109 = sphi 0, %s111
    %s112 = sphi 0, %s109
    %s113 = sphi 0, %s112
    %s129 = sphi 0, %s113
    %s139 = sphi 0, %s141
    %s142 = sphi 0, %s139
    %s143 = sphi 0, %s142
    %s159 = sphi 0, %s143
  $region4: #{self_attention.3} parent=0 // loop_header_branch
    %12 = sbr.rel (%p10) target = $region8
  $region5: #{self_attention.3} parent=0 // loop_body
    %s14 = ssub.s32 %s9, 1
    %s15 = ssub.s32 %s9, 2
    %s28 = sadd.s32 1, %s19
    %p29 = scmp.ge.s32.totalorder %s28, 4
    %s30 = scalar_select %p29, 0, %s28
    %s31 = sadd.s32 1, %s18
    %s32 = scalar_select %p29, %s31, %s18
    %p33 = scmp.ge.s32.totalorder %s32, 4
    %s34 = scalar_select %p33, 0, %s32
    %s35 = sadd.s32 1, %s17
    %s36 = scalar_select %p33, %s35, %s17
    %p37 = scmp.ge.s32.totalorder %s36, 4
    %s38 = scalar_select %p37, 0, %s36
    %s39 = sadd.s32 1, %s16
    %s40 = scalar_select %p37, %s39, %s16
    %p41 = scmp.ge.s32.totalorder %s40, 2
    %s42 = scalar_select %p41, 0, %s40
    %s43 = ssub.s32 %s16, %s42
    %s44 = ssub.s32 %s17, %s38
    %s45 = sor.u32 %s43, %s44
    %s46 = ssub.s32 %s18, %s34
    %s47 = sor.u32 %s45, %s46
    %p48 = scmp.eq.s32.totalorder %s47, 0
    %s50 = sadd.s32 %s49, 1
    %s51 = scalar_select %p48, %s49, %s50
    %p54 = pneg %p48
    %p55 = scmp.eq.s32.totalorder %s9, 127
    %p56 = por %p54, %p55
    %p57 = scmp.ne.s32.totalorder %s49, %s52
    %p58 = scmp.eq.s32.totalorder %s9, 0
    %p59 = por %p57, %p58
    %p60 = scmp.ne.s32.totalorder %s49, %s52
    %p61 = scmp.eq.s32.totalorder %s14, 127
    %p62 = por %p60, %p61
    %p63 = scmp.ne.s32.totalorder %s52, %s53
    %p64 = scmp.eq.s32.totalorder %s14, 0
    %p65 = por %p63, %p64
    %p66 = scmp.ne.s32.totalorder %s52, %s53
    %p67 = scmp.eq.s32.totalorder %s15, 127
    %p68 = por %p66, %p67
    %p70 = scmp.ne.s32.totalorder %s53, %s69
    %p71 = scmp.eq.s32.totalorder %s15, 0
    %p72 = por %p70, %p71
    %s73 = ssub.s32 %s16, %s42
    %s74 = ssub.s32 %s17, %s38
    %s75 = sor.u32 %s73, %s74
    %s76 = ssub.s32 %s19, %s30
    %s77 = sor.u32 %s75, %s76
    %p78 = scmp.eq.s32.totalorder %s77, 0
    %s80 = sadd.s32 %s79, 1
    %s81 = scalar_select %p78, %s79, %s80
    %p84 = pneg %p78
    %p85 = scmp.eq.s32.totalorder %s9, 127
    %p86 = por %p84, %p85
    %p87 = scmp.ne.s32.totalorder %s79, %s82
    %p88 = scmp.eq.s32.totalorder %s9, 0
    %p89 = por %p87, %p88
    %p90 = scmp.ne.s32.totalorder %s79, %s82
    %p91 = scmp.eq.s32.totalorder %s14, 127
    %p92 = por %p90, %p91
    %p93 = scmp.ne.s32.totalorder %s82, %s83
    %p94 = scmp.eq.s32.totalorder %s14, 0
    %p95 = por %p93, %p94
    %p96 = scmp.ne.s32.totalorder %s82, %s83
    %p97 = scmp.eq.s32.totalorder %s15, 127
    %p98 = por %p96, %p97
    %p100 = scmp.ne.s32.totalorder %s83, %s99
    %p101 = scmp.eq.s32.totalorder %s15, 0
    %p102 = por %p100, %p101
    %s103 = ssub.s32 %s16, %s42
    %s104 = ssub.s32 %s17, %s38
    %s105 = sor.u32 %s103, %s104
    %s106 = ssub.s32 %s19, %s30
    %s107 = sor.u32 %s105, %s106
    %p108 = scmp.eq.s32.totalorder %s107, 0
    %s110 = sadd.s32 %s109, 1
    %s111 = scalar_select %p108, %s109, %s110
    %p114 = pneg %p108
    %p115 = scmp.eq.s32.totalorder %s9, 127
    %p116 = por %p114, %p115
    %p117 = scmp.ne.s32.totalorder %s109, %s112
    %p118 = scmp.eq.s32.totalorder %s9, 0
    %p119 = por %p117, %p118
    %p120 = scmp.ne.s32.totalorder %s109, %s112
    %p121 = scmp.eq.s32.totalorder %s14, 127
    %p122 = por %p120, %p121
    %p123 = scmp.ne.s32.totalorder %s112, %s113
    %p124 = scmp.eq.s32.totalorder %s14, 0
    %p125 = por %p123, %p124
    %p126 = scmp.ne.s32.totalorder %s112, %s113
    %p127 = scmp.eq.s32.totalorder %s15, 127
    %p128 = por %p126, %p127
    %p130 = scmp.ne.s32.totalorder %s113, %s129
    %p131 = scmp.eq.s32.totalorder %s15, 0
    %p132 = por %p130, %p131
    %s133 = ssub.s32 %s16, %s42
    %s134 = ssub.s32 %s17, %s38
    %s135 = sor.u32 %s133, %s134
    %s136 = ssub.s32 %s18, %s34
    %s137 = sor.u32 %s135, %s136
    %p138 = scmp.eq.s32.totalorder %s137, 0
    %s140 = sadd.s32 %s139, 1
    %s141 = scalar_select %p138, %s139, %s140
    %p144 = pneg %p138
    %p145 = scmp.eq.s32.totalorder %s9, 127
    %p146 = por %p144, %p145
    %p147 = scmp.ne.s32.totalorder %s139, %s142
    %p148 = scmp.eq.s32.totalorder %s9, 0
    %p149 = por %p147, %p148
    %p150 = scmp.ne.s32.totalorder %s139, %s142
    %p151 = scmp.eq.s32.totalorder %s14, 127
    %p152 = por %p150, %p151
    %p153 = scmp.ne.s32.totalorder %s142, %s143
    %p154 = scmp.eq.s32.totalorder %s14, 0
    %p155 = por %p153, %p154
    %p156 = scmp.ne.s32.totalorder %s142, %s143
    %p157 = scmp.eq.s32.totalorder %s15, 127
    %p158 = por %p156, %p157
    %p160 = scmp.ne.s32.totalorder %s143, %s159
    %p161 = scmp.eq.s32.totalorder %s15, 0
    %p162 = por %p160, %p161
    %p163 = scmp.le.s32.totalorder 1, %s9
    %p164 = scmp.lt.s32.totalorder %s9, 129
    %p165 = pnand %p163, %p164
    %p166 = pneg %p165
    // Predicated region
    $region9: #{self_attention.3} parent=5 // pred_check
      _
    $region10: #{self_attention.3} parent=5 // pred_check_branch
      %168 = sbr.rel (%p165) target = $region12
    $region11: #{self_attention.3} parent=5 // pred_region
      %s169 = ssub.s32 %s9, 1
    $region12: #{self_attention.3} parent=5 // pred_fallthru
      _
    %p170 = scmp.lt.s32.totalorder %s9, 128
    // Predicated region
    $region13: #{self_attention.3} parent=5 // pred_check
      %p171 = pneg %p170
    $region14: #{self_attention.3} parent=5 // pred_check_branch
      %173 = sbr.rel (%p171) target = $region16
    $region15: #{self_attention.3} parent=5 // pred_region
      // Predicated region
      $region17: #{self_attention.3} parent=15 // pred_check
        %p174 = pneg %p59
      $region18: #{self_attention.3} parent=15 // pred_check_branch
        %176 = sbr.rel (%p174) target = $region20
      $region19: #{self_attention.3} parent=15 // pred_region
        %s177 = smul.u32 2, %s18
        %p178 = scmp.lt.s32.totalorder %s16, 1
        %s179 = scalar_select %p178, %s16, 1
        %p180 = scmp.lt.s32.totalorder %s17, 3
        %s181 = scalar_select %p180, %s17, 3
        %p182 = scmp.lt.s32.totalorder %s177, 7
        %s183 = scalar_select %p182, %s177, 7
        %s184 = smul.addr %s181, 8
        %s185 = sadd.s32 %s183, %s184
        %s186 = smul.addr %s179, 32
        %s187 = sadd.s32 %s185, %s186
        %s188 = smul.addr %s187, 8
        %s189 = scalar_lea.vmem %s0, %s188
        %s190 = smul.u32 2, %s18
      $region20: #{self_attention.3} parent=15 // pred_fallthru
        _
      // Predicated region
      $region21: #{self_attention.3} parent=15 // pred_check
        %p191 = pneg %p89
      $region22: #{self_attention.3} parent=15 // pred_check_branch
        %193 = sbr.rel (%p191) target = $region24
      $region23: #{self_attention.3} parent=15 // pred_region
        %s194 = smul.u32 2, %s19
        %p195 = scmp.lt.s32.totalorder %s16, 1
        %s196 = scalar_select %p195, %s16, 1
        %p197 = scmp.lt.s32.totalorder %s17, 3
        %s198 = scalar_select %p197, %s17, 3
        %p199 = scmp.lt.s32.totalorder %s194, 7
        %s200 = scalar_select %p199, %s194, 7
        %s201 = smul.addr %s198, 8
        %s202 = sadd.s32 %s200, %s201
        %s203 = smul.addr %s196, 32
        %s204 = sadd.s32 %s202, %s203
        %s205 = smul.addr %s204, 8
        %s206 = scalar_lea.vmem %s1, %s205
        %s207 = smul.u32 2, %s19
      $region24: #{self_attention.3} parent=15 // pred_fallthru
        _
      // Predicated region
      $region25: #{self_attention.3} parent=15 // pred_check
        %p208 = pneg %p119
      $region26: #{self_attention.3} parent=15 // pred_check_branch
        %210 = sbr.rel (%p208) target = $region28
      $region27: #{self_attention.3} parent=15 // pred_region
        %s211 = smul.u32 2, %s19
        %p212 = scmp.lt.s32.totalorder %s16, 1
        %s213 = scalar_select %p212, %s16, 1
        %p214 = scmp.lt.s32.totalorder %s17, 3
        %s215 = scalar_select %p214, %s17, 3
        %p216 = scmp.lt.s32.totalorder %s211, 7
        %s217 = scalar_select %p216, %s211, 7
        %s218 = smul.addr %s215, 8
        %s219 = sadd.s32 %s217, %s218
        %s220 = smul.addr %s213, 32
        %s221 = sadd.s32 %s219, %s220
        %s222 = smul.addr %s221, 8
        %s223 = scalar_lea.vmem %s2, %s222
        %s224 = smul.u32 2, %s19
      $region28: #{self_attention.3} parent=15 // pred_fallthru
        _
    $region16: #{self_attention.3} parent=5 // pred_fallthru
      _
    %p225 = scmp.le.s32.totalorder 1, %s9
    %p226 = scmp.lt.s32.totalorder %s9, 129
    %p227 = pnand %p225, %p226
    %p228 = pneg %p227
    // Predicated region
    $region29: #{self_attention.3} parent=5 // pred_check
      _
    $region30: #{self_attention.3} parent=5 // pred_check_branch
      %230 = sbr.rel (%p227) target = $region32
    $region31: #{self_attention.3} parent=5 // pred_region
      %s231 = ssub.s32 %s9, 1
      %s232 = smul.u32 2, %s22
      %p233 = scmp.lt.s32.totalorder %s20, 1
      %s234 = scalar_select %p233, %s20, 1
      %p235 = scmp.lt.s32.totalorder %s21, 3
      %s236 = scalar_select %p235, %s21, 3
      %p237 = scmp.lt.s32.totalorder %s232, 7
      %s238 = scalar_select %p237, %s232, 7
      %s239 = smul.addr %s236, 8
      %s240 = sadd.s32 %s238, %s239
      %s241 = smul.addr %s234, 32
      %s242 = sadd.s32 %s240, %s241
      %s243 = smul.addr %s242, 8
      %s244 = scalar_lea.vmem %s0, %s243
      %p245 = pneg %p65
      %p246 = pneg %p62
      %s247 = smul.u32 2, %s23
      %p248 = scmp.lt.s32.totalorder %s20, 1
      %s249 = scalar_select %p248, %s20, 1
      %p250 = scmp.lt.s32.totalorder %s21, 3
      %s251 = scalar_select %p250, %s21, 3
      %p252 = scmp.lt.s32.totalorder %s247, 7
      %s253 = scalar_select %p252, %s247, 7
      %s254 = smul.addr %s251, 8
      %s255 = sadd.s32 %s253, %s254
      %s256 = smul.addr %s249, 32
      %s257 = sadd.s32 %s255, %s256
      %s258 = smul.addr %s257, 8
      %s259 = scalar_lea.vmem %s1, %s258
      %p260 = pneg %p95
      %p261 = pneg %p92
      %s262 = smul.u32 2, %s23
      %p263 = scmp.lt.s32.totalorder %s20, 1
      %s264 = scalar_select %p263, %s20, 1
      %p265 = scmp.lt.s32.totalorder %s21, 3
      %s266 = scalar_select %p265, %s21, 3
      %p267 = scmp.lt.s32.totalorder %s262, 7
      %s268 = scalar_select %p267, %s262, 7
      %s269 = smul.addr %s266, 8
      %s270 = sadd.s32 %s268, %s269
      %s271 = smul.addr %s264, 32
      %s272 = sadd.s32 %s270, %s271
      %s273 = smul.addr %s272, 8
      %s274 = scalar_lea.vmem %s2, %s273
      %p275 = pneg %p125
      %p276 = pneg %p122
      %p277 = pneg %p155
      %p278 = pneg %p152
      %s279 = smul.u32 2, %s22
      %p280 = scmp.lt.s32.totalorder %s20, 1
      %s281 = scalar_select %p280, %s20, 1
      %p282 = scmp.lt.s32.totalorder %s21, 3
      %s283 = scalar_select %p282, %s21, 3
      %p284 = scmp.lt.s32.totalorder %s279, 7
      %s285 = scalar_select %p284, %s279, 7
      %s286 = smul.addr %s283, 8
      %s287 = sadd.s32 %s285, %s286
      %s288 = smul.addr %s281, 32
      %s289 = sadd.s32 %s287, %s288
      %s290 = smul.addr %s289, 8
      %s291 = scalar_lea.vmem %s3, %s290
      %s292 = smul.u32 2, %s22
      %p293 = scmp.lt.s32.totalorder %s20, 1
      %s294 = scalar_select %p293, %s20, 1
      %p295 = scmp.lt.s32.totalorder %s21, 3
      %s296 = scalar_select %p295, %s21, 3
      %p297 = scmp.lt.s32.totalorder %s292, 7
      %s298 = scalar_select %p297, %s292, 7
      %s299 = smul.addr %s296, 8
      %s300 = sadd.s32 %s298, %s299
      %s301 = smul.addr %s294, 32
      %s302 = sadd.s32 %s300, %s301
      %s303 = smul.addr %s302, 8
      %s304 = scalar_lea.vmem %s0, %s303
      %s305 = smul.u32 2, %s22
      %s306 = smul.u32 2, %s23
      %p307 = scmp.lt.s32.totalorder %s20, 1
      %s308 = scalar_select %p307, %s20, 1
      %p309 = scmp.lt.s32.totalorder %s21, 3
      %s310 = scalar_select %p309, %s21, 3
      %p311 = scmp.lt.s32.totalorder %s306, 7
      %s312 = scalar_select %p311, %s306, 7
      %s313 = smul.addr %s310, 8
      %s314 = sadd.s32 %s312, %s313
      %s315 = smul.addr %s308, 32
      %s316 = sadd.s32 %s314, %s315
      %s317 = smul.addr %s316, 8
      %s318 = scalar_lea.vmem %s1, %s317
      %s319 = smul.u32 2, %s23
      %s320 = smul.u32 2, %s23
      %p321 = scmp.lt.s32.totalorder %s20, 1
      %s322 = scalar_select %p321, %s20, 1
      %p323 = scmp.lt.s32.totalorder %s21, 3
      %s324 = scalar_select %p323, %s21, 3
      %p325 = scmp.lt.s32.totalorder %s320, 7
      %s326 = scalar_select %p325, %s320, 7
      %s327 = smul.addr %s324, 8
      %s328 = sadd.s32 %s326, %s327
      %s329 = smul.addr %s322, 32
      %s330 = sadd.s32 %s328, %s329
      %s331 = smul.addr %s330, 8
      %s332 = scalar_lea.vmem %s2, %s331
      %s333 = smul.u32 2, %s23
      %s334 = smul.u32 2, %s22
      %p335 = scmp.lt.s32.totalorder %s20, 1
      %s336 = scalar_select %p335, %s20, 1
      %p337 = scmp.lt.s32.totalorder %s21, 3
      %s338 = scalar_select %p337, %s21, 3
      %p339 = scmp.lt.s32.totalorder %s334, 7
      %s340 = scalar_select %p339, %s334, 7
      %s341 = smul.addr %s338, 8
      %s342 = sadd.s32 %s340, %s341
      %s343 = smul.addr %s336, 32
      %s344 = sadd.s32 %s342, %s343
      %s345 = smul.addr %s344, 8
      %s346 = scalar_lea.vmem %s3, %s345
      %s347 = smul.u32 2, %s22
      %p348 = scmp.eq.s32.totalorder %s23, 0
      // Predicated region
      $region33: #{self_attention.3} parent=31 // pred_check
        %p349 = pneg %p348
      $region34: #{self_attention.3} parent=31 // pred_check_branch
        %351 = sbr.rel (%p349) target = $region36
      $region35: #{self_attention.3} parent=31 // pred_region
        %vm352 = vcmask 7168
        %353 = vst.msk [vmem:[#allocation2] sm:$0xff] %vm352, -inf
        %354 = vst.msk [vmem:[#allocation2 + $0x8] sm:$0xff] %vm352, -inf
        %355 = vst.msk [vmem:[#allocation3] sm:$0xff] %vm352, 0.0
        %356 = vst.msk [vmem:[#allocation3 + $0x8] sm:$0xff] %vm352, 0.0
        %vm357 = vcmask 64512
        %358 = vst.msk [vmem:[#allocation4] sm:$0xff] %vm357, 0.0
        %359 = vst.msk [vmem:[#allocation4 + $0x8] sm:$0xff] %vm357, 0.0
      $region36: #{self_attention.3} parent=31 // pred_fallthru
        _
      %v360 = vld [vmem:[%s304] sm:$0xff]
      %v361 = vld [vmem:[%s304 + $0x8] sm:$0xff]
      %v362 = vld [vmem:[%s318] sm:$0xff]
      %v363 = vld [vmem:[%s318 + $0x8] sm:$0xff]
      %v364 = vld [vmem:[%s332] sm:$0xff]
      %v365 = vld [vmem:[%s332 + $0x8] sm:$0xff]
      %vm366 = vcmask 64512
      %v368 = vsel %vm366, %v360, 0
      %v371 = vsel %vm366, %v361, 0
      %v374 = vsel %vm366, %v362, 0
      %v377 = vsel %vm366, %v363, 0
      %379 = vmatprep.subr.mxu0 0.0
      %380 = vmatpush1.xpose.msra.mxu0 %v374
      %381 = vmatprep.subr.mxu0 0.0
      %382 = vmatpush1.xpose.msra.mxu0 %v377
      %383 = vmatprep.subr.mxu0 0.0
      %384 = vmatpush1.xpose.msra.mxu0 0.0
      %385 = vmatprep.subr.mxu0 0.0
      %386 = vmatpush1.xpose.msra.mxu0 0.0
      %387 = vmatprep.subr.mxu0 0.0
      %388 = vmatpush1.xpose.msra.mxu0 0.0
      %389 = vmatprep.subr.mxu0 0.0
      %390 = vmatpush1.xpose.msra.mxu0 0.0
      %391 = vmatprep.subr.mxu0 0.0
      %392 = vmatpush1.xpose.msra.mxu0 0.0
      %393 = vmatprep.subr.mxu0 0.0
      %394 = vmatpush1.xpose.msra.mxu0 0.0
      %395 = vmatprep.subr.mxu0 0.0
      %396 = vmatpush1.xpose.msra.mxu0 0.0
      %397 = vmatprep.subr.mxu0 0.0
      %398 = vmatpush1.xpose.msra.mxu0 0.0
      %399 = vmatprep.subr.mxu0 0.0
      %400 = vmatpush1.xpose.msra.mxu0 0.0
      %401 = vmatprep.subr.mxu0 0.0
      %402 = vmatpush1.xpose.msra.mxu0 0.0
      %403 = vmatprep.subr.mxu0 0.0
      %404 = vmatpush1.xpose.msra.mxu0 0.0
      %405 = vmatprep.subr.mxu0 0.0
      %406 = vmatpush1.xpose.msra.mxu0 0.0
      %407 = vmatprep.subr.mxu0 0.0
      %408 = vmatpush1.xpose.msra.mxu0 0.0
      %409 = vmatprep.subr.mxu0 0.0
      %410 = vmatpush1.xpose.msra.mxu0 0.0
      %411 = vmatprep.subr.mxu0 0.0
      %412 = vmatpush1.xpose.msra.mxu0 0.0
      %413 = vmatprep.subr.mxu0 0.0
      %414 = vmatpush1.xpose.msra.mxu0 0.0
      %415 = vmatprep.subr.mxu0 0.0
      %416 = vmatpush1.xpose.msra.mxu0 0.0
      %417 = vmatprep.subr.mxu0 0.0
      %418 = vmatpush1.xpose.msra.mxu0 0.0
      %419 = vmatprep.subr.mxu0 0.0
      %420 = vmatpush1.xpose.msra.mxu0 0.0
      %421 = vmatprep.subr.mxu0 0.0
      %422 = vmatpush1.xpose.msra.mxu0 0.0
      %423 = vmatprep.subr.mxu0 0.0
      %424 = vmatpush1.xpose.msra.mxu0 0.0
      %425 = vmatprep.subr.mxu0 0.0
      %426 = vmatpush1.xpose.msra.mxu0 0.0
      %427 = vmatprep.subr.mxu0 0.0
      %428 = vmatpush1.xpose.msra.mxu0 0.0
      %429 = vmatprep.subr.mxu0 0.0
      %430 = vmatpush1.xpose.msra.mxu0 0.0
      %431 = vmatprep.subr.mxu0 0.0
      %432 = vmatpush1.xpose.msra.mxu0 0.0
      %433 = vmatprep.subr.mxu0 0.0
      %434 = vmatpush1.xpose.msra.mxu0 0.0
      %435 = vmatprep.subr.mxu0 0.0
      %436 = vmatpush1.xpose.msra.mxu0 0.0
      %437 = vmatprep.subr.mxu0 0.0
      %438 = vmatpush1.xpose.msra.mxu0 0.0
      %439 = vmatprep.subr.mxu0 0.0
      %440 = vmatpush1.xpose.msra.mxu0 0.0
      %441 = vmatprep.subr.mxu0 0.0
      %442 = vmatpush1.xpose.msra.mxu0 0.0
      %443 = vmatprep.mubr.f32.mxu0 0.0
      %444 = vmatmul.mubr.f32.gmra.mrb[0].mxu0 %v368
      %v445 = vpop.f32.mrb[0].mxu0
      %v446 = vadd.f32 0.0, %v445
      %v447 = vpop.f32.mrb[0].mxu0
      %448 = vmatprep.mubr.f32.mxu0 0.0
      %449 = vmatmul.mubr.f32.gmra.mrb[0].mxu0 %v371
      %v450 = vpop.f32.mrb[0].mxu0
      %v451 = vadd.f32 0.0, %v450
      %v452 = vpop.f32.mrb[0].mxu0
      %453 = vdwg.mxu0
      %v454 = vld [vmem:[#allocation2] sm:$0xff]
      %v455 = vld [vmem:[#allocation2 + $0x8] sm:$0xff]
      %vm456 = vcmask 130048
      %v457 = vsel %vm456, %v446, -inf
      %458 = vmax.xlane.f32.xlu0 %v457
      %v459 = vpop.xlane.xlu0 %458
      %v460 = vsel %vm456, %v451, -inf
      %461 = vmax.xlane.f32.xlu0 %v460
      %v462 = vpop.xlane.xlu0 %461
      %v463 = vmax.f32 %v454, %v459
      %v464 = vmax.f32 %v455, %v462
      %v465 = vsub.f32 %v454, %v463
      %v466 = vsub.f32 %v455, %v464
      %v467 = vmul.f32 %v465, 1.442695
      %v468 = vpow.pop %v467
      %v469 = vmul.f32 %v466, 1.442695
      %v470 = vpow.pop %v469
      %472 = vset.pattern.permute.xlu0 0
      %473 = vperm.xlu0 %472, %v463
      %v474 = vpop.permute.xlu0 %473
      %477 = vset.pattern.permute.xlu0 0
      %478 = vperm.xlu0 %477, %v464
      %v479 = vpop.permute.xlu0 %478
      %v481 = vsub.f32 %v446, %v474
      %v482 = vsub.f32 %v451, %v479
      %v483 = vmul.f32 %v481, 1.442695
      %v484 = vpow.pop %v483
      %v485 = vmul.f32 %v482, 1.442695
      %v486 = vpow.pop %v485
      %v487 = vld [vmem:[#allocation3] sm:$0xff]
      %v488 = vld [vmem:[#allocation3 + $0x8] sm:$0xff]
      %v489 = vmul.f32 %v468, %v487
      %v490 = vmul.f32 %v470, %v488
      %v491 = vsel %vm456, %v484, 0.0
      %492 = vadd.xlane.f32.xlu0 %v491
      %v493 = vpop.xlane.xlu0 %492
      %v494 = vsel %vm456, %v486, 0.0
      %495 = vadd.xlane.f32.xlu0 %v494
      %v496 = vpop.xlane.xlu0 %495
      %v497 = vadd.f32 %v489, %v493
      %v498 = vadd.f32 %v490, %v496
      %vm499 = vcmask 7168
      %500 = vst.msk [vmem:[#allocation3] sm:$0xff] %vm499, %v497
      %501 = vst.msk [vmem:[#allocation3 + $0x8] sm:$0xff] %vm499, %v498
      %v502 = vld [vmem:[#allocation4] sm:$0xff]
      %v503 = vld [vmem:[#allocation4 + $0x8] sm:$0xff]
      %505 = vset.pattern.permute.xlu0 0
      %506 = vperm.xlu0 %505, %v468
      %v507 = vpop.permute.xlu0 %506
      %510 = vset.pattern.permute.xlu0 0
      %511 = vperm.xlu0 %510, %v470
      %v512 = vpop.permute.xlu0 %511
      %v514 = vmul.f32 %v507, %v502
      %v515 = vmul.f32 %v512, %v503
      %v517 = vsel %vm456, %v484, 0
      %v520 = vsel %vm456, %v486, 0
      %522 = vmatprep.subr.mxu0 0.0
      %523 = vmatpush1.msra.mxu0 %v364
      %524 = vmatprep.subr.mxu0 0.0
      %525 = vmatpush1.msra.mxu0 %v365
      %526 = vmatprep.subr.mxu0 0.0
      %527 = vmatpush1.msra.mxu0 0.0
      %528 = vmatprep.subr.mxu0 0.0
      %529 = vmatpush1.msra.mxu0 0.0
      %530 = vmatprep.subr.mxu0 0.0
      %531 = vmatpush1.msra.mxu0 0.0
      %532 = vmatprep.subr.mxu0 0.0
      %533 = vmatpush1.msra.mxu0 0.0
      %534 = vmatprep.subr.mxu0 0.0
      %535 = vmatpush1.msra.mxu0 0.0
      %536 = vmatprep.subr.mxu0 0.0
      %537 = vmatpush1.msra.mxu0 0.0
      %538 = vmatprep.subr.mxu0 0.0
      %539 = vmatpush1.msra.mxu0 0.0
      %540 = vmatprep.subr.mxu0 0.0
      %541 = vmatpush1.msra.mxu0 0.0
      %542 = vmatprep.subr.mxu0 0.0
      %543 = vmatpush1.msra.mxu0 0.0
      %544 = vmatprep.subr.mxu0 0.0
      %545 = vmatpush1.msra.mxu0 0.0
      %546 = vmatprep.subr.mxu0 0.0
      %547 = vmatpush1.msra.mxu0 0.0
      %548 = vmatprep.subr.mxu0 0.0
      %549 = vmatpush1.msra.mxu0 0.0
      %550 = vmatprep.subr.mxu0 0.0
      %551 = vmatpush1.msra.mxu0 0.0
      %552 = vmatprep.subr.mxu0 0.0
      %553 = vmatpush1.msra.mxu0 0.0
      %554 = vmatprep.subr.mxu0 0.0
      %555 = vmatpush1.msra.mxu0 0.0
      %556 = vmatprep.subr.mxu0 0.0
      %557 = vmatpush1.msra.mxu0 0.0
      %558 = vmatprep.subr.mxu0 0.0
      %559 = vmatpush1.msra.mxu0 0.0
      %560 = vmatprep.subr.mxu0 0.0
      %561 = vmatpush1.msra.mxu0 0.0
      %562 = vmatprep.subr.mxu0 0.0
      %563 = vmatpush1.msra.mxu0 0.0
      %564 = vmatprep.subr.mxu0 0.0
      %565 = vmatpush1.msra.mxu0 0.0
      %566 = vmatprep.subr.mxu0 0.0
      %567 = vmatpush1.msra.mxu0 0.0
      %568 = vmatprep.subr.mxu0 0.0
      %569 = vmatpush1.msra.mxu0 0.0
      %570 = vmatprep.subr.mxu0 0.0
      %571 = vmatpush1.msra.mxu0 0.0
      %572 = vmatprep.subr.mxu0 0.0
      %573 = vmatpush1.msra.mxu0 0.0
      %574 = vmatprep.subr.mxu0 0.0
      %575 = vmatpush1.msra.mxu0 0.0
      %576 = vmatprep.subr.mxu0 0.0
      %577 = vmatpush1.msra.mxu0 0.0
      %578 = vmatprep.subr.mxu0 0.0
      %579 = vmatpush1.msra.mxu0 0.0
      %580 = vmatprep.subr.mxu0 0.0
      %581 = vmatpush1.msra.mxu0 0.0
      %582 = vmatprep.subr.mxu0 0.0
      %583 = vmatpush1.msra.mxu0 0.0
      %584 = vmatprep.subr.mxu0 0.0
      %585 = vmatpush1.msra.mxu0 0.0
      %586 = vmatprep.mubr.f32.mxu0 0.0
      %587 = vmatmul.mubr.f32.gmra.mrb[0].mxu0 %v517
      %v588 = vpop.f32.mrb[0].mxu0
      %v589 = vadd.f32 0.0, %v588
      %v590 = vpop.f32.mrb[0].mxu0
      %591 = vmatprep.mubr.f32.mxu0 0.0
      %592 = vmatmul.mubr.f32.gmra.mrb[0].mxu0 %v520
      %v593 = vpop.f32.mrb[0].mxu0
      %v594 = vadd.f32 0.0, %v593
      %v595 = vpop.f32.mrb[0].mxu0
      %596 = vdwg.mxu0
      %v597 = vadd.f32 %v514, %v589
      %v598 = vadd.f32 %v515, %v594
      %599 = vst.msk [vmem:[#allocation4] sm:$0xff] %vm366, %v597
      %600 = vst.msk [vmem:[#allocation4 + $0x8] sm:$0xff] %vm366, %v598
      %601 = vst.msk [vmem:[#allocation2] sm:$0xff] %vm499, %v463
      %602 = vst.msk [vmem:[#allocation2 + $0x8] sm:$0xff] %vm499, %v464
      %p603 = scmp.eq.s32.totalorder %s23, 3
      // Predicated region
      $region37: #{self_attention.3} parent=31 // pred_check
        %p604 = pneg %p603
      $region38: #{self_attention.3} parent=31 // pred_check_branch
        %606 = sbr.rel (%p604) target = $region40
      $region39: #{self_attention.3} parent=31 // pred_region
        %v607 = vld [vmem:[#allocation4] sm:$0xff]
        %v608 = vld [vmem:[#allocation4 + $0x8] sm:$0xff]
        %v609 = vld [vmem:[#allocation3] sm:$0xff]
        %v610 = vld [vmem:[#allocation3 + $0x8] sm:$0xff]
        %612 = vset.pattern.permute.xlu0 0
        %613 = vperm.xlu0 %612, %v609
        %v614 = vpop.permute.xlu0 %613
        %617 = vset.pattern.permute.xlu0 0
        %618 = vperm.xlu0 %617, %v610
        %v619 = vpop.permute.xlu0 %618
        %v621 = vrcp.pop %v614
        %v622 = vmul.f32 %v607, %v621
        %v623 = vrcp.pop %v619
        %v624 = vmul.f32 %v608, %v623
        %625 = vst.msk [vmem:[%s346] sm:$0xff] %vm366, %v622
        %626 = vst.msk [vmem:[%s346 + $0x8] sm:$0xff] %vm366, %v624
      $region40: #{self_attention.3} parent=31 // pred_fallthru
        _
      %s627 = smul.u32 2, %s22
      %p628 = scmp.lt.s32.totalorder %s20, 1
      %s629 = scalar_select %p628, %s20, 1
      %p630 = scmp.lt.s32.totalorder %s21, 3
      %s631 = scalar_select %p630, %s21, 3
      %p632 = scmp.lt.s32.totalorder %s627, 7
      %s633 = scalar_select %p632, %s627, 7
      %s634 = smul.addr %s631, 8
      %s635 = sadd.s32 %s633, %s634
      %s636 = smul.addr %s629, 32
      %s637 = sadd.s32 %s635, %s636
      %s638 = smul.addr %s637, 8
      %s639 = scalar_lea.vmem %s3, %s638
      // Predicated region
      $region41: #{self_attention.3} parent=31 // pred_check
        %p640 = pneg %p152
      $region42: #{self_attention.3} parent=31 // pred_check_branch
        %642 = sbr.rel (%p640) target = $region44
      $region43: #{self_attention.3} parent=31 // pred_region
        %s643 = smul.u32 2, %s22
      $region44: #{self_attention.3} parent=31 // pred_fallthru
        _
    $region32: #{self_attention.3} parent=5 // pred_fallthru
      _
    %p644 = scmp.le.s32.totalorder 2, %s9
    // Predicated region
    $region45: #{self_attention.3} parent=5 // pred_check
      %p645 = pneg %p644
    $region46: #{self_attention.3} parent=5 // pred_check_branch
      %647 = sbr.rel (%p645) target = $region48
    $region47: #{self_attention.3} parent=5 // pred_region
      %s648 = ssub.s32 %s9, 2
      // Predicated region
      $region49: #{self_attention.3} parent=47 // pred_check
        %p649 = pneg %p158
      $region50: #{self_attention.3} parent=47 // pred_check_branch
        %651 = sbr.rel (%p649) target = $region52
      $region51: #{self_attention.3} parent=47 // pred_region
        %s652 = smul.u32 2, %s26
        %p653 = scmp.lt.s32.totalorder %s24, 1
        %s654 = scalar_select %p653, %s24, 1
        %p655 = scmp.lt.s32.totalorder %s25, 3
        %s656 = scalar_select %p655, %s25, 3
        %p657 = scmp.lt.s32.totalorder %s652, 7
        %s658 = scalar_select %p657, %s652, 7
        %s659 = smul.addr %s656, 8
        %s660 = sadd.s32 %s658, %s659
        %s661 = smul.addr %s654, 32
        %s662 = sadd.s32 %s660, %s661
        %s663 = smul.addr %s662, 8
        %s664 = scalar_lea.vmem %s3, %s663
      $region52: #{self_attention.3} parent=47 // pred_fallthru
        _
    $region48: #{self_attention.3} parent=5 // pred_fallthru
      _
  $region6: #{self_attention.3} parent=0 // loop_footer
    %s13 = sadd.s32 1, %s9
  $region7: #{self_attention.3} parent=0 // loop_footer_branch
    %8 = sbr.rel target = $region3
  $region8: #{self_attention.3} parent=0 // loop_exit
    _

</llo_original>
